<compile_context>
chip_gen: v5e
topology: v5e:2x2
jax: 0.10.0
libtpu: 0.0.40
codegen_flags: <defaults>
</compile_context>

<pallas_src>
import functools

import jax
import jax.numpy as jnp
from jax.experimental import pallas as pl
from jax.experimental.pallas import tpu as pltpu


def _round_up(a, b):
    return (a + b - 1) // b * b


# ---------------------------------------------------------------------------
# Pass 1: per-channel adaptive avg/max pool over HW (tiled reduction).
# ---------------------------------------------------------------------------
def _pool_kernel(x_ref, mean_ref, max_ref, *, hw, thw, needs_mask):
    # x_ref block: (1, C, THW) channel-first; outputs (1, C, 1) stay resident across t.
    t = pl.program_id(1)
    x = x_ref[0].astype(jnp.float32)                     # accumulate in f32

    if needs_mask:
        # Only the last HW tile can contain zero-padding; zeros are harmless for the
        # sum but must be excluded from the max.
        lane = jax.lax.broadcasted_iota(jnp.int32, x.shape, 1)
        x_for_max = jnp.where(t * thw + lane < hw, x, -jnp.inf)
    else:
        x_for_max = x

    part_sum = jnp.sum(x, axis=1, keepdims=True)         # (C, 1)
    part_max = jnp.max(x_for_max, axis=1, keepdims=True)  # (C, 1)

    @pl.when(t == 0)
    def _():
        mean_ref[0] = part_sum
        max_ref[0] = part_max

    @pl.when(t > 0)
    def _():
        mean_ref[0] = mean_ref[0] + part_sum
        max_ref[0] = jnp.maximum(max_ref[0], part_max)

    @pl.when(t == pl.num_programs(1) - 1)
    def _():
        mean_ref[0] = mean_ref[0] * (1.0 / hw)


# ---------------------------------------------------------------------------
# Pass 2: local branch (1x1 conv -> ReLU -> 1x1 conv -> sigmoid) + gate + multiply.
# ---------------------------------------------------------------------------
def _local_apply_kernel(gate_ref, x_ref, w1_ref, b1_ref, w2_ref, b2_ref, o_ref):
    # Blocks: x (1, C, THW) channel-first; gate (1, C, 1); weights are full tiny tiles.
    x = x_ref[0]                                         # (C, THW), I/O dtype (no full-block upcast)
    w1 = w1_ref[...].astype(x.dtype)                     # (Cr, C): cast the tiny operand, not x
    h = jnp.dot(w1, x, preferred_element_type=jnp.float32) + b1_ref[...]        # (Cr, THW) f32
    h = jnp.maximum(h, 0.0)
    z = jnp.dot(w2_ref[...], h, preferred_element_type=jnp.float32) + b2_ref[...]  # (C, THW) f32
    # sigmoid = 1 / (1 + exp(-z)): exp and the approximate reciprocal both go to the EUP.
    local = pl.reciprocal(1.0 + jnp.exp(-z), approx=True)
    weight = local + gate_ref[0]                         # pooled gate (C, 1) broadcasts over lanes
    o_ref[0] = (x * weight.astype(x.dtype)).astype(o_ref.dtype)


# ---------------------------------------------------------------------------
# Wrapper.
# ---------------------------------------------------------------------------
def hca_layer(x_nchw, params, *, max_lane_tile=8192):
    """x_nchw: (B, C, H, W) like PyTorch.  Returns (B, C, H, W)."""
    B, C, H, W = x_nchw.shape
    HW = H * W
    dtype = x_nchw.dtype
    itemsize = jnp.dtype(dtype).itemsize

    (wm1, bm1, wm2, bm2,
     wx1, bx1, wx2, bx2,
     wl1, bl1, wl2, bl2) = params

    # Native channel-first layout; free reshape, no transposes.
    x = x_nchw.reshape(B, C, HW)

    # HW tile: multiple of 128 lanes, capped at ~2 MiB per block so double-buffered
    # input + output blocks (plus f32 temporaries) stay well inside VMEM on v7x.
    per_lane_bytes = C * itemsize
    cap = max(128, ((2 * 1024 * 1024) // per_lane_bytes) // 128 * 128)
    thw = min(_round_up(HW, 128), max_lane_tile, cap)
    hw_pad = _round_up(HW, thw)
    n_t = hw_pad // thw
    needs_mask = hw_pad != HW
    if needs_mask:
        x = jnp.pad(x, ((0, 0), (0, 0), (0, hw_pad - HW)))

    block_bytes = C * thw * itemsize
    needed = 4 * block_bytes + 3 * C * thw * 4 + (2 << 20)   # 2x dbl-buffered in/out + f32 temps
    vmem_limit = int(min(64 << 20, max(32 << 20, needed)))

    def _fixed(shape):
        zeros = (0,) * len(shape)
        return pl.BlockSpec(shape, lambda b, t: zeros)

    # ---- Pass 1: pooled mean / max (one read of x for both reductions). ----
    mean, mx = pl.pallas_call(
        functools.partial(_pool_kernel, hw=HW, thw=thw, needs_mask=needs_mask),
        out_shape=(jax.ShapeDtypeStruct((B, C, 1), jnp.float32),
                   jax.ShapeDtypeStruct((B, C, 1), jnp.float32)),
        grid_spec=pltpu.PrefetchScalarGridSpec(
            num_scalar_prefetch=0,
            grid=(B, n_t),
            in_specs=[pl.BlockSpec((1, C, thw), lambda b, t: (b, 0, t))],
            out_specs=[pl.BlockSpec((1, C, 1), lambda b, t: (b, 0, 0)),
                       pl.BlockSpec((1, C, 1), lambda b, t: (b, 0, 0))],
        ),
        compiler_params=pltpu.CompilerParams(
            dimension_semantics=("parallel", "arbitrary"),
            vmem_limit_bytes=vmem_limit,
        ),
    )(x)

    # ---- Pooled squeeze-excite branches: O(B*C*C/r) FLOPs -> plain jnp is cheaper
    #      than re-running them per HW tile inside the kernel. ----
    hp = jax.lax.Precision.HIGHEST

    def se(v, w1, b1, w2, b2):
        h = jnp.maximum(jnp.dot(v, w1.T, precision=hp) + b1[:, 0], 0.0)
        return jax.nn.sigmoid(jnp.dot(h, w2.T, precision=hp) + b2[:, 0])

    gate = (se(mean[:, :, 0], wm1, bm1, wm2, bm2)
            + se(mx[:, :, 0], wx1, bx1, wx2, bx2))[:, :, None].astype(jnp.float32)  # (B, C, 1)

    # ---- Pass 2: local branch + gating + elementwise apply (lane-dense output). ----
    out = pl.pallas_call(
        _local_apply_kernel,
        out_shape=jax.ShapeDtypeStruct((B, C, hw_pad), dtype),
        grid_spec=pltpu.PrefetchScalarGridSpec(
            num_scalar_prefetch=0,
            grid=(B, n_t),
            in_specs=[pl.BlockSpec((1, C, 1), lambda b, t: (b, 0, 0)),     # pooled gate
                      pl.BlockSpec((1, C, thw), lambda b, t: (b, 0, t)),   # x tile
                      _fixed(wl1.shape), _fixed(bl1.shape),
                      _fixed(wl2.shape), _fixed(bl2.shape)],
            out_specs=pl.BlockSpec((1, C, thw), lambda b, t: (b, 0, t)),
        ),
        compiler_params=pltpu.CompilerParams(
            dimension_semantics=("parallel", "parallel"),
            vmem_limit_bytes=vmem_limit,
        ),
    )(gate, x, wl1, bl1, wl2, bl2)

    if needs_mask:
        out = out[:, :, :HW]
    return out.reshape(B, C, H, W)


# ---------------------------------------------------------------------------
# Parameters (PyTorch conv layout: w1 (Cr, C), w2 (C, Cr); biases kept as columns).
# ---------------------------------------------------------------------------
def init_params(key, C, reduction=16):
    Cr = max(1, C // reduction)
    keys = jax.random.split(key, 12)
    s1 = 1.0 / (C ** 0.5)
    s2 = 1.0 / (Cr ** 0.5)
    params = []
    for i in range(3):                      # conv_mean, conv_max, local
        k = keys[4 * i: 4 * i + 4]
        w1 = s1 * jax.random.normal(k[0], (Cr, C), jnp.float32)
        b1 = s1 * jax.random.normal(k[1], (Cr, 1), jnp.float32)
        w2 = s2 * jax.random.normal(k[2], (C, Cr), jnp.float32)
        b2 = s2 * jax.random.normal(k[3], (C, 1), jnp.float32)
        params += [w1, b1, w2, b2]
    return tuple(params)


def hca_reference(x_nchw, params):
    """Pure-JAX reference (channel-first) for correctness check."""
    (wm1, bm1, wm2, bm2,
     wx1, bx1, wx2, bx2,
     wl1, bl1, wl2, bl2) = params
    B, C, H, W = x_nchw.shape
    x = x_nchw.reshape(B, C, H * W).astype(jnp.float32)
    hp = jax.lax.Precision.HIGHEST

    def branch(v, w1, b1, w2, b2):
        h = jnp.maximum(jnp.einsum('rc,bcn->brn', w1, v, precision=hp) + b1[None], 0.0)
        return jax.nn.sigmoid(jnp.einsum('cr,brn->bcn', w2, h, precision=hp) + b2[None])

    mean = jnp.mean(x, axis=2, keepdims=True)
    mx = jnp.max(x, axis=2, keepdims=True)
    w = (branch(mean, wm1, bm1, wm2, bm2)
         + branch(mx, wx1, bx1, wx2, bx2)
         + branch(x, wl1, bl1, wl2, bl2))
    out = x * w
    return out.reshape(B, C, H, W).astype(x_nchw.dtype)


if __name__ == "__main__":
    key = jax.random.PRNGKey(0)
    k_x, k_p = jax.random.split(key)

    B, C, H, W = 2, 64, 16, 16
    reduction = 16
    x = jax.random.normal(k_x, (B, C, H, W), jnp.float32)
    params = init_params(k_p, C, reduction)

    # max_lane_tile=128 forces multiple HW tiles even at this small demo size so the
    # tiled-reduction and tiled-apply paths are exercised (2 tiles per batch element).
    hca = jax.jit(functools.partial(hca_layer, max_lane_tile=128))
    out = jax.block_until_ready(hca(x, params))
    ref = jax.block_until_ready(hca_reference(x, params))

    assert out.shape == (B, C, H, W)
    assert out.dtype == x.dtype
    # Tolerance covers the EUP approximate reciprocal used for the in-kernel sigmoid
    # (typically ~1e-4 relative) plus f32 MXU rounding.
    err = float(jnp.max(jnp.abs(out.astype(jnp.float32) - ref.astype(jnp.float32))))
    assert jnp.allclose(out, ref, atol=2e-2, rtol=2e-2), err
    print("KERNEL_OK")
</pallas_src>

<mosaic_0001>
module attributes {stable_mosaic.version = 11 : i64} {
  func.func @_pool_kernel(%arg0: i32, %arg1: i32, %arg2: memref<1x64x128xf32, #tpu.memory_space<vmem>>, %arg3: memref<1x64x1xf32, #tpu.memory_space<vmem>>, %arg4: memref<1x64x1xf32, #tpu.memory_space<vmem>>) attributes {dimension_semantics = [#tpu.dimension_semantics<parallel>, #tpu.dimension_semantics<arbitrary>], iteration_bounds = array<i64: 2, 2>, scalar_prefetch = 0 : i64, scratch_operands = 0 : i64, tpu.core_type = #tpu.core_type<tc>, window_params = [{transform_indices = @transform_0, window_bounds = array<i64: 1, 64, 128>}, {transform_indices = @transform_1, window_bounds = array<i64: 1, 64, 1>}, {transform_indices = @transform_2, window_bounds = array<i64: 1, 64, 1>}]} {
    %c0 = arith.constant 0 : index
    %c0_0 = arith.constant 0 : index
    %c0_1 = arith.constant 0 : index
    %0 = vector.load %arg2[%c0, %c0_0, %c0_1] : memref<1x64x128xf32, #tpu.memory_space<vmem>>, vector<1x64x128xf32>
    %1 = vector.shape_cast %0 : vector<1x64x128xf32> to vector<64x128xf32>
    %cst = arith.constant dense<0.000000e+00> : vector<64xf32>
    %2 = vector.multi_reduction <add>, %1, %cst [1] : vector<64x128xf32> to vector<64xf32>
    %3 = vector.shape_cast %2 : vector<64xf32> to vector<64x1xf32>
    %cst_2 = arith.constant dense<0xFF800000> : vector<64xf32>
    %4 = vector.multi_reduction <maximumf>, %1, %cst_2 [1] : vector<64x128xf32> to vector<64xf32>
    %5 = vector.shape_cast %4 : vector<64xf32> to vector<64x1xf32>
    %c0_i32 = arith.constant 0 : i32
    %6 = arith.cmpi eq, %arg1, %c0_i32 : i32
    %7 = arith.extui %6 : i1 to i32
    %c0_i32_3 = arith.constant 0 : i32
    %8 = arith.cmpi ne, %7, %c0_i32_3 : i32
    scf.if %8 {
      %c0_7 = arith.constant 0 : index
      %c0_8 = arith.constant 0 : index
      %c0_9 = arith.constant 0 : index
      %15 = vector.load %arg3[%c0_7, %c0_8, %c0_9] : memref<1x64x1xf32, #tpu.memory_space<vmem>>, vector<1x64x1xf32>
      %16 = vector.shape_cast %15 : vector<1x64x1xf32> to vector<64x1xf32>
      %17 = vector.shape_cast %3 : vector<64x1xf32> to vector<1x64x1xf32>
      tpu.vector_store %arg3[%c0_7, %c0_8, %c0_9], %17 {strides = array<i32>} : memref<1x64x1xf32, #tpu.memory_space<vmem>>, vector<1x64x1xf32>,
      %c0_10 = arith.constant 0 : index
      %c0_11 = arith.constant 0 : index
      %c0_12 = arith.constant 0 : index
      %18 = vector.load %arg4[%c0_10, %c0_11, %c0_12] : memref<1x64x1xf32, #tpu.memory_space<vmem>>, vector<1x64x1xf32>
      %19 = vector.shape_cast %18 : vector<1x64x1xf32> to vector<64x1xf32>
      %20 = vector.shape_cast %5 : vector<64x1xf32> to vector<1x64x1xf32>
      tpu.vector_store %arg4[%c0_10, %c0_11, %c0_12], %20 {strides = array<i32>} : memref<1x64x1xf32, #tpu.memory_space<vmem>>, vector<1x64x1xf32>,
    } else {
    }
    %c0_i32_4 = arith.constant 0 : i32
    %9 = arith.cmpi sgt, %arg1, %c0_i32_4 : i32
    %10 = arith.extui %9 : i1 to i32
    %c0_i32_5 = arith.constant 0 : i32
    %11 = arith.cmpi ne, %10, %c0_i32_5 : i32
    scf.if %11 {
      %c0_7 = arith.constant 0 : index
      %c0_8 = arith.constant 0 : index
      %c0_9 = arith.constant 0 : index
      %15 = vector.load %arg3[%c0_7, %c0_8, %c0_9] : memref<1x64x1xf32, #tpu.memory_space<vmem>>, vector<1x64x1xf32>
      %16 = vector.shape_cast %15 : vector<1x64x1xf32> to vector<64x1xf32>
      %17 = arith.addf %16, %3 : vector<64x1xf32>
      %c0_10 = arith.constant 0 : index
      %c0_11 = arith.constant 0 : index
      %c0_12 = arith.constant 0 : index
      %18 = vector.load %arg3[%c0_10, %c0_11, %c0_12] : memref<1x64x1xf32, #tpu.memory_space<vmem>>, vector<1x64x1xf32>
      %19 = vector.shape_cast %18 : vector<1x64x1xf32> to vector<64x1xf32>
      %20 = vector.shape_cast %17 : vector<64x1xf32> to vector<1x64x1xf32>
      tpu.vector_store %arg3[%c0_10, %c0_11, %c0_12], %20 {strides = array<i32>} : memref<1x64x1xf32, #tpu.memory_space<vmem>>, vector<1x64x1xf32>,
      %c0_13 = arith.constant 0 : index
      %c0_14 = arith.constant 0 : index
      %c0_15 = arith.constant 0 : index
      %21 = vector.load %arg4[%c0_13, %c0_14, %c0_15] : memref<1x64x1xf32, #tpu.memory_space<vmem>>, vector<1x64x1xf32>
      %22 = vector.shape_cast %21 : vector<1x64x1xf32> to vector<64x1xf32>
      %23 = arith.maximumf %22, %5 : vector<64x1xf32>
      %c0_16 = arith.constant 0 : index
      %c0_17 = arith.constant 0 : index
      %c0_18 = arith.constant 0 : index
      %24 = vector.load %arg4[%c0_16, %c0_17, %c0_18] : memref<1x64x1xf32, #tpu.memory_space<vmem>>, vector<1x64x1xf32>
      %25 = vector.shape_cast %24 : vector<1x64x1xf32> to vector<64x1xf32>
      %26 = vector.shape_cast %23 : vector<64x1xf32> to vector<1x64x1xf32>
      tpu.vector_store %arg4[%c0_16, %c0_17, %c0_18], %26 {strides = array<i32>} : memref<1x64x1xf32, #tpu.memory_space<vmem>>, vector<1x64x1xf32>,
    } else {
    }
    %c1_i32 = arith.constant 1 : i32
    %12 = arith.cmpi eq, %arg1, %c1_i32 : i32
    %13 = arith.extui %12 : i1 to i32
    %c0_i32_6 = arith.constant 0 : i32
    %14 = arith.cmpi ne, %13, %c0_i32_6 : i32
    scf.if %14 {
      %c0_7 = arith.constant 0 : index
      %c0_8 = arith.constant 0 : index
      %c0_9 = arith.constant 0 : index
      %15 = vector.load %arg3[%c0_7, %c0_8, %c0_9] : memref<1x64x1xf32, #tpu.memory_space<vmem>>, vector<1x64x1xf32>
      %16 = vector.shape_cast %15 : vector<1x64x1xf32> to vector<64x1xf32>
      %cst_10 = arith.constant 3.906250e-03 : f32
      %17 = vector.broadcast %cst_10 : f32 to vector<64x1xf32>
      %18 = arith.mulf %16, %17 : vector<64x1xf32>
      %c0_11 = arith.constant 0 : index
      %c0_12 = arith.constant 0 : index
      %c0_13 = arith.constant 0 : index
      %19 = vector.load %arg3[%c0_11, %c0_12, %c0_13] : memref<1x64x1xf32, #tpu.memory_space<vmem>>, vector<1x64x1xf32>
      %20 = vector.shape_cast %19 : vector<1x64x1xf32> to vector<64x1xf32>
      %21 = vector.shape_cast %18 : vector<64x1xf32> to vector<1x64x1xf32>
      tpu.vector_store %arg3[%c0_11, %c0_12, %c0_13], %21 {strides = array<i32>} : memref<1x64x1xf32, #tpu.memory_space<vmem>>, vector<1x64x1xf32>,
    } else {
    }
    return
  }
  func.func @transform_0(%arg0: i32, %arg1: i32) -> (i32, i32, i32) {
    %c0_i32 = arith.constant 0 : i32
    %c0_i32_0 = arith.constant 0 : i32
    return %arg0, %c0_i32, %arg1 : i32, i32, i32
  }
  func.func @transform_1(%arg0: i32, %arg1: i32) -> (i32, i32, i32) {
    %c0_i32 = arith.constant 0 : i32
    %c0_i32_0 = arith.constant 0 : i32
    %c0_i32_1 = arith.constant 0 : i32
    return %arg0, %c0_i32, %c0_i32_0 : i32, i32, i32
  }
  func.func @transform_2(%arg0: i32, %arg1: i32) -> (i32, i32, i32) {
    %c0_i32 = arith.constant 0 : i32
    %c0_i32_0 = arith.constant 0 : i32
    %c0_i32_1 = arith.constant 0 : i32
    return %arg0, %c0_i32, %c0_i32_0 : i32, i32, i32
  }
}

module attributes {stable_mosaic.version = 11 : i64} {
  func.func @_local_apply_kernel(%arg0: i32, %arg1: i32, %arg2: memref<1x64x1xf32, #tpu.memory_space<vmem>>, %arg3: memref<1x64x128xf32, #tpu.memory_space<vmem>>, %arg4: memref<4x64xf32, #tpu.memory_space<vmem>>, %arg5: memref<4x1xf32, #tpu.memory_space<vmem>>, %arg6: memref<64x4xf32, #tpu.memory_space<vmem>>, %arg7: memref<64x1xf32, #tpu.memory_space<vmem>>, %arg8: memref<1x64x128xf32, #tpu.memory_space<vmem>>) attributes {dimension_semantics = [#tpu.dimension_semantics<parallel>, #tpu.dimension_semantics<parallel>], iteration_bounds = array<i64: 2, 2>, scalar_prefetch = 0 : i64, scratch_operands = 0 : i64, tpu.core_type = #tpu.core_type<tc>, window_params = [{transform_indices = @transform_0, window_bounds = array<i64: 1, 64, 1>}, {transform_indices = @transform_1, window_bounds = array<i64: 1, 64, 128>}, {pipeline_mode = #tpu.pipeline_mode<synchronous>, transform_indices = @transform_2, window_bounds = array<i64: 4, 64>}, {pipeline_mode = #tpu.pipeline_mode<synchronous>, transform_indices = @transform_3, window_bounds = array<i64: 4, 1>}, {pipeline_mode = #tpu.pipeline_mode<synchronous>, transform_indices = @transform_4, window_bounds = array<i64: 64, 4>}, {pipeline_mode = #tpu.pipeline_mode<synchronous>, transform_indices = @transform_5, window_bounds = array<i64: 64, 1>}, {transform_indices = @transform_6, window_bounds = array<i64: 1, 64, 128>}]} {
    %c0 = arith.constant 0 : index
    %c0_0 = arith.constant 0 : index
    %c0_1 = arith.constant 0 : index
    %0 = vector.load %arg3[%c0, %c0_0, %c0_1] : memref<1x64x128xf32, #tpu.memory_space<vmem>>, vector<1x64x128xf32>
    %1 = vector.shape_cast %0 : vector<1x64x128xf32> to vector<64x128xf32>
    %c0_2 = arith.constant 0 : index
    %c0_3 = arith.constant 0 : index
    %2 = vector.load %arg4[%c0_2, %c0_3] : memref<4x64xf32, #tpu.memory_space<vmem>>, vector<4x64xf32>
    %cst = arith.constant dense<0.000000e+00> : vector<4x128xf32>
    %3 = tpu.matmul %2, %1, %cst {dimension_numbers = #tpu.dot_dimension_numbers<[1], [0], [0], [1], [0, 0, 1, 1], [], []>} : vector<4x64xf32>, vector<64x128xf32>, vector<4x128xf32> -> vector<4x128xf32>
    %c0_4 = arith.constant 0 : index
    %c0_5 = arith.constant 0 : index
    %4 = vector.load %arg5[%c0_4, %c0_5] : memref<4x1xf32, #tpu.memory_space<vmem>>, vector<4x1xf32>
    %5 = vector.broadcast %4 : vector<4x1xf32> to vector<4x128xf32>
    %6 = arith.addf %3, %5 : vector<4x128xf32>
    %cst_6 = arith.constant 0.000000e+00 : f32
    %7 = vector.broadcast %cst_6 : f32 to vector<4x128xf32>
    %8 = arith.maximumf %6, %7 : vector<4x128xf32>
    %c0_7 = arith.constant 0 : index
    %c0_8 = arith.constant 0 : index
    %9 = vector.load %arg6[%c0_7, %c0_8] : memref<64x4xf32, #tpu.memory_space<vmem>>, vector<64x4xf32>
    %cst_9 = arith.constant dense<0.000000e+00> : vector<64x128xf32>
    %10 = tpu.matmul %9, %8, %cst_9 {dimension_numbers = #tpu.dot_dimension_numbers<[1], [0], [0], [1], [0, 0, 1, 1], [], []>} : vector<64x4xf32>, vector<4x128xf32>, vector<64x128xf32> -> vector<64x128xf32>
    %c0_10 = arith.constant 0 : index
    %c0_11 = arith.constant 0 : index
    %11 = vector.load %arg7[%c0_10, %c0_11] : memref<64x1xf32, #tpu.memory_space<vmem>>, vector<64x1xf32>
    %12 = vector.broadcast %11 : vector<64x1xf32> to vector<64x128xf32>
    %13 = arith.addf %10, %12 : vector<64x128xf32>
    %cst_12 = arith.constant 0.000000e+00 : f32
    %14 = vector.broadcast %cst_12 : f32 to vector<64x128xf32>
    %15 = arith.subf %14, %13 : vector<64x128xf32>
    %16 = math.exp %15 : vector<64x128xf32>
    %cst_13 = arith.constant 1.000000e+00 : f32
    %17 = vector.broadcast %cst_13 : f32 to vector<64x128xf32>
    %18 = arith.addf %17, %16 : vector<64x128xf32>
    %19 = tpu.reciprocal %18 {approx = true} : vector<64x128xf32> -> vector<64x128xf32>
    %c0_14 = arith.constant 0 : index
    %c0_15 = arith.constant 0 : index
    %c0_16 = arith.constant 0 : index
    %20 = vector.load %arg2[%c0_14, %c0_15, %c0_16] : memref<1x64x1xf32, #tpu.memory_space<vmem>>, vector<1x64x1xf32>
    %21 = vector.shape_cast %20 : vector<1x64x1xf32> to vector<64x1xf32>
    %22 = vector.broadcast %21 : vector<64x1xf32> to vector<64x128xf32>
    %23 = arith.addf %19, %22 : vector<64x128xf32>
    %24 = arith.mulf %1, %23 : vector<64x128xf32>
    %c0_17 = arith.constant 0 : index
    %c0_18 = arith.constant 0 : index
    %c0_19 = arith.constant 0 : index
    %25 = vector.load %arg8[%c0_17, %c0_18, %c0_19] : memref<1x64x128xf32, #tpu.memory_space<vmem>>, vector<1x64x128xf32>
    %26 = vector.shape_cast %25 : vector<1x64x128xf32> to vector<64x128xf32>
    %27 = vector.shape_cast %24 : vector<64x128xf32> to vector<1x64x128xf32>
    tpu.vector_store %arg8[%c0_17, %c0_18, %c0_19], %27 {strides = array<i32>} : memref<1x64x128xf32, #tpu.memory_space<vmem>>, vector<1x64x128xf32>,
    return
  }
  func.func @transform_0(%arg0: i32, %arg1: i32) -> (i32, i32, i32) {
    %c0_i32 = arith.constant 0 : i32
    %c0_i32_0 = arith.constant 0 : i32
    %c0_i32_1 = arith.constant 0 : i32
    return %arg0, %c0_i32, %c0_i32_0 : i32, i32, i32
  }
  func.func @transform_1(%arg0: i32, %arg1: i32) -> (i32, i32, i32) {
    %c0_i32 = arith.constant 0 : i32
    %c0_i32_0 = arith.constant 0 : i32
    return %arg0, %c0_i32, %arg1 : i32, i32, i32
  }
  func.func @transform_2(%arg0: i32, %arg1: i32) -> (i32, i32) {
    %c0_i32 = arith.constant 0 : i32
    %c0_i32_0 = arith.constant 0 : i32
    %c0_i32_1 = arith.constant 0 : i32
    return %c0_i32, %c0_i32_0 : i32, i32
  }
  func.func @transform_3(%arg0: i32, %arg1: i32) -> (i32, i32) {
    %c0_i32 = arith.constant 0 : i32
    %c0_i32_0 = arith.constant 0 : i32
    %c0_i32_1 = arith.constant 0 : i32
    return %c0_i32, %c0_i32_0 : i32, i32
  }
  func.func @transform_4(%arg0: i32, %arg1: i32) -> (i32, i32) {
    %c0_i32 = arith.constant 0 : i32
    %c0_i32_0 = arith.constant 0 : i32
    %c0_i32_1 = arith.constant 0 : i32
    return %c0_i32, %c0_i32_0 : i32, i32
  }
  func.func @transform_5(%arg0: i32, %arg1: i32) -> (i32, i32) {
    %c0_i32 = arith.constant 0 : i32
    %c0_i32_0 = arith.constant 0 : i32
    %c0_i32_1 = arith.constant 0 : i32
    return %c0_i32, %c0_i32_0 : i32, i32
  }
  func.func @transform_6(%arg0: i32, %arg1: i32) -> (i32, i32, i32) {
    %c0_i32 = arith.constant 0 : i32
    %c0_i32_0 = arith.constant 0 : i32
    return %arg0, %c0_i32, %arg1 : i32, i32, i32
  }
}

</mosaic_0001>

<llo_original>
// kernel: hca_layer.2
$region0: #{hca_layer.2}
  #allocation0 [shape = 'u32[]', space=smem, size = 0x4, offset = 0x4, fixed_abs, tag = 'smem constant byte address 0x4 - core index']
  #allocation1 [shape = 'u32[72,128]{1,0:T(1,128)}', space=vmem, size = 0x9000, scoped, tag = 'internal scratch']
  %s0 = inlined_call_operand.vmem [shape: f32[2,64,256], index: 0, kind: input, shape index: {}]
  %s1 = inlined_call_operand.vmem [shape: f32[2,64,1], index: 1, kind: output, shape index: {0}]
  %s2 = inlined_call_operand.vmem [shape: f32[2,64,1], index: 2, kind: output, shape index: {1}]
  %3 = xla_tuple %s1, %s2
  %s4 = sld [smem:[#allocation0]]
  $region95: #{hca_layer.2} parent=0
    _
  %s6 = ssub.s32 1, %s4
  %s7 = scalar_select 0, %s6, %s4
  $region1: #{hca_layer.2} parent=0
    #allocation2 [shape = 'u8[65536]{0}', space=vmem, size = 0x10000, scoped, tag = 'input window, operand 0']
    loop: start=0, step=1, limit=6
    $region2: #{hca_layer.2} parent=1 // loop_pre_header
      _
    $region3: #{hca_layer.2} parent=1 // loop_header
      %s9 = sphi 0, %s13
      %p10 = scmp.ge.s32.totalorder %s9, 6
      %s16 = sphi 0, %s28
      %s17 = sphi 0, %s24
      %s18 = sphi 0, %s16
      %s19 = sphi 0, %s17
      %s20 = sphi 0, %s18
      %s21 = sphi 0, %s19
      %s33 = sphi 0, %s35
      %s36 = sphi 0, %s33
      %s37 = sphi 0, %s36
      %s53 = sphi 0, %s37
      %s59 = sphi 0, %s61
      %s62 = sphi 0, %s59
      %s63 = sphi 0, %s62
      %s79 = sphi 0, %s63
      %s85 = sphi 0, %s87
      %s88 = sphi 0, %s85
      %s89 = sphi 0, %s88
      %s105 = sphi 0, %s89
    $region4: #{hca_layer.2} parent=1 // loop_header_branch
      %12 = sbr.rel (%p10) target = $region8
    $region5: #{hca_layer.2} parent=1 // loop_body
      %s14 = ssub.s32 %s9, 1
      %s15 = ssub.s32 %s9, 2
      %s22 = sadd.s32 1, %s17
      %p23 = scmp.ge.s32.totalorder %s22, 2
      %s24 = scalar_select %p23, 0, %s22
      %s25 = sadd.s32 1, %s16
      %s26 = scalar_select %p23, %s25, %s16
      %p27 = scmp.ge.s32.totalorder %s26, 2
      %s28 = scalar_select %p27, 0, %s26
      %s29 = ssub.s32 %s16, %s28
      %s30 = ssub.s32 %s17, %s24
      %s31 = sor.u32 %s29, %s30
      %p32 = scmp.eq.s32.totalorder %s31, 0
      %s34 = sadd.s32 %s33, 1
      %s35 = scalar_select %p32, %s33, %s34
      %p38 = pneg %p32
      %p39 = scmp.eq.s32.totalorder %s9, 3
      %p40 = por %p38, %p39
      %p41 = scmp.ne.s32.totalorder %s33, %s36
      %p42 = scmp.eq.s32.totalorder %s9, 0
      %p43 = por %p41, %p42
      %p44 = scmp.ne.s32.totalorder %s33, %s36
      %p45 = scmp.eq.s32.totalorder %s14, 3
      %p46 = por %p44, %p45
      %p47 = scmp.ne.s32.totalorder %s36, %s37
      %p48 = scmp.eq.s32.totalorder %s14, 0
      %p49 = por %p47, %p48
      %p50 = scmp.ne.s32.totalorder %s36, %s37
      %p51 = scmp.eq.s32.totalorder %s15, 3
      %p52 = por %p50, %p51
      %p54 = scmp.ne.s32.totalorder %s37, %s53
      %p55 = scmp.eq.s32.totalorder %s15, 0
      %p56 = por %p54, %p55
      %s57 = ssub.s32 %s16, %s28
      %p58 = scmp.eq.s32.totalorder %s57, 0
      %s60 = sadd.s32 %s59, 1
      %s61 = scalar_select %p58, %s59, %s60
      %p64 = pneg %p58
      %p65 = scmp.eq.s32.totalorder %s9, 3
      %p66 = por %p64, %p65
      %p67 = scmp.ne.s32.totalorder %s59, %s62
      %p68 = scmp.eq.s32.totalorder %s9, 0
      %p69 = por %p67, %p68
      %p70 = scmp.ne.s32.totalorder %s59, %s62
      %p71 = scmp.eq.s32.totalorder %s14, 3
      %p72 = por %p70, %p71
      %p73 = scmp.ne.s32.totalorder %s62, %s63
      %p74 = scmp.eq.s32.totalorder %s14, 0
      %p75 = por %p73, %p74
      %p76 = scmp.ne.s32.totalorder %s62, %s63
      %p77 = scmp.eq.s32.totalorder %s15, 3
      %p78 = por %p76, %p77
      %p80 = scmp.ne.s32.totalorder %s63, %s79
      %p81 = scmp.eq.s32.totalorder %s15, 0
      %p82 = por %p80, %p81
      %s83 = ssub.s32 %s16, %s28
      %p84 = scmp.eq.s32.totalorder %s83, 0
      %s86 = sadd.s32 %s85, 1
      %s87 = scalar_select %p84, %s85, %s86
      %p90 = pneg %p84
      %p91 = scmp.eq.s32.totalorder %s9, 3
      %p92 = por %p90, %p91
      %p93 = scmp.ne.s32.totalorder %s85, %s88
      %p94 = scmp.eq.s32.totalorder %s9, 0
      %p95 = por %p93, %p94
      %p96 = scmp.ne.s32.totalorder %s85, %s88
      %p97 = scmp.eq.s32.totalorder %s14, 3
      %p98 = por %p96, %p97
      %p99 = scmp.ne.s32.totalorder %s88, %s89
      %p100 = scmp.eq.s32.totalorder %s14, 0
      %p101 = por %p99, %p100
      %p102 = scmp.ne.s32.totalorder %s88, %s89
      %p103 = scmp.eq.s32.totalorder %s15, 3
      %p104 = por %p102, %p103
      %p106 = scmp.ne.s32.totalorder %s89, %s105
      %p107 = scmp.eq.s32.totalorder %s15, 0
      %p108 = por %p106, %p107
      %p109 = scmp.le.s32.totalorder 1, %s9
      %p110 = scmp.lt.s32.totalorder %s9, 5
      %p111 = pnand %p109, %p110
      %p112 = pneg %p111
      // Predicated region
      $region9: #{hca_layer.2} parent=5 // pred_check
        _
      $region10: #{hca_layer.2} parent=5 // pred_check_branch
        %114 = sbr.rel (%p111) target = $region12
      $region11: #{hca_layer.2} parent=5 // pred_region
        %s115 = ssub.s32 %s9, 1
      $region12: #{hca_layer.2} parent=5 // pred_fallthru
        _
      %p116 = scmp.lt.s32.totalorder %s9, 4
      // Predicated region
      $region13: #{hca_layer.2} parent=5 // pred_check
        %p117 = pneg %p116
      $region14: #{hca_layer.2} parent=5 // pred_check_branch
        %119 = sbr.rel (%p117) target = $region16
      $region15: #{hca_layer.2} parent=5 // pred_region
        // Predicated region
        $region17: #{hca_layer.2} parent=15 // pred_check
          %p120 = pneg %p43
        $region18: #{hca_layer.2} parent=15 // pred_check_branch
          %122 = sbr.rel (%p120) target = $region20
        $region19: #{hca_layer.2} parent=15 // pred_region
          %s123 = sand.u32 %s33, 1
          %s124 = sand.u32 %s33, 1
          %s125 = smul.addr %s124, 64
          %s126 = scalar_lea.vmem [#allocation2], %s125
          %s127 = smul.addr %s16, 16
          %s128 = sadd.s32 %s17, %s127
          %s129 = smul.addr %s128, 8
          %s130 = scalar_lea.vmem %s0, %s129
          // Predicated region
          $region21: #{hca_layer.2} parent=19 // pred_check
            _
          $region22: #{hca_layer.2} parent=19 // pred_check_branch
            %132 = sbr.rel (0) target = $region24
          $region23: #{hca_layer.2} parent=19 // pred_region
            // Predicated region
            $region25: #{hca_layer.2} parent=23 // pred_check
              _
            $region26: #{hca_layer.2} parent=23 // pred_check_branch
              %134 = sbr.rel (0) target = $region28
            $region27: #{hca_layer.2} parent=23 // pred_region
              // Predicated region
              $region40: #{hca_layer.2} parent=27 // pred_check
                _
              $region41: #{hca_layer.2} parent=27 // pred_check_branch
                %164 = sbr.rel (0) target = $region43
              $region42: #{hca_layer.2} parent=27 // pred_region
                loop: start=0, step=1, limit=1
                $region44: #{hca_layer.2} parent=42 // loop_pre_header
                  _
                $region45: #{hca_layer.2} parent=42 // loop_header
                  %s166 = sphi 0, %s170
                  %p167 = scmp.ge.s32.totalorder %s166, 1
                  %s171 = sphi %s130, %s130
                  %s172 = sphi %s126, %s126
                $region46: #{hca_layer.2} parent=42 // loop_header_branch
                  %169 = sbr.rel (%p167) target = $region50
                $region47: #{hca_layer.2} parent=42 // loop_body
                  %v173 = vld [vmem:[%s171] sm:$0xff]
                  %174 = vst [vmem:[%s172] sm:$0xff] %v173
                  %v175 = vld [vmem:[%s171 + $0x10] sm:$0xff]
                  %176 = vst [vmem:[%s172 + $0x8] sm:$0xff] %v175
                  %v177 = vld [vmem:[%s171 + $0x20] sm:$0xff]
                  %178 = vst [vmem:[%s172 + $0x10] sm:$0xff] %v177
                  %v179 = vld [vmem:[%s171 + $0x30] sm:$0xff]
                  %180 = vst [vmem:[%s172 + $0x18] sm:$0xff] %v179
                  %v181 = vld [vmem:[%s171 + $0x40] sm:$0xff]
                  %182 = vst [vmem:[%s172 + $0x20] sm:$0xff] %v181
                  %v183 = vld [vmem:[%s171 + $0x50] sm:$0xff]
                  %184 = vst [vmem:[%s172 + $0x28] sm:$0xff] %v183
                  %v185 = vld [vmem:[%s171 + $0x60] sm:$0xff]
                  %186 = vst [vmem:[%s172 + $0x30] sm:$0xff] %v185
                  %v187 = vld [vmem:[%s171 + $0x70] sm:$0xff]
                  %188 = vst [vmem:[%s172 + $0x38] sm:$0xff] %v187
                $region48: #{hca_layer.2} parent=42 // loop_footer
                  %s170 = sadd.s32 1, %s166
                $region49: #{hca_layer.2} parent=42 // loop_footer_branch
                  %165 = sbr.rel target = $region45
                $region50: #{hca_layer.2} parent=42 // loop_exit
                  _
              $region43: #{hca_layer.2} parent=27 // pred_fallthru
                _
              // Predicated region
              $region51: #{hca_layer.2} parent=27 // pred_check
                _
              $region52: #{hca_layer.2} parent=27 // pred_check_branch
                %190 = sbr.rel target = $region54
              $region53: #{hca_layer.2} parent=27 // pred_region
                _
              $region54: #{hca_layer.2} parent=27 // pred_fallthru
                _
            $region28: #{hca_layer.2} parent=23 // pred_fallthru
              _
            // Predicated region
            $region29: #{hca_layer.2} parent=23 // pred_check
              _
            $region30: #{hca_layer.2} parent=23 // pred_check_branch
              %136 = sbr.rel target = $region32
            $region31: #{hca_layer.2} parent=23 // pred_region
              %s138 = ssub.s32 256, 1
              loop: start=0, step=1, limit=1
              $region33: #{hca_layer.2} parent=31 // loop_pre_header
                _
              $region34: #{hca_layer.2} parent=31 // loop_header
                %s140 = sphi 0, %s144
                %p141 = scmp.ge.s32.totalorder %s140, 1
                %s145 = sphi %s130, %s130
                %s146 = sphi %s126, %s126
              $region35: #{hca_layer.2} parent=31 // loop_header_branch
                %143 = sbr.rel (%p141) target = $region39
              $region36: #{hca_layer.2} parent=31 // loop_body
                %v147 = vld [vmem:[%s145] sm:%s138]
                %148 = vst [vmem:[%s146] sm:%s138] %v147
                %v149 = vld [vmem:[%s145 + $0x10] sm:%s138]
                %150 = vst [vmem:[%s146 + $0x8] sm:%s138] %v149
                %v151 = vld [vmem:[%s145 + $0x20] sm:%s138]
                %152 = vst [vmem:[%s146 + $0x10] sm:%s138] %v151
                %v153 = vld [vmem:[%s145 + $0x30] sm:%s138]
                %154 = vst [vmem:[%s146 + $0x18] sm:%s138] %v153
                %v155 = vld [vmem:[%s145 + $0x40] sm:%s138]
                %156 = vst [vmem:[%s146 + $0x20] sm:%s138] %v155
                %v157 = vld [vmem:[%s145 + $0x50] sm:%s138]
                %158 = vst [vmem:[%s146 + $0x28] sm:%s138] %v157
                %v159 = vld [vmem:[%s145 + $0x60] sm:%s138]
                %160 = vst [vmem:[%s146 + $0x30] sm:%s138] %v159
                %v161 = vld [vmem:[%s145 + $0x70] sm:%s138]
                %162 = vst [vmem:[%s146 + $0x38] sm:%s138] %v161
              $region37: #{hca_layer.2} parent=31 // loop_footer
                %s144 = sadd.s32 1, %s140
              $region38: #{hca_layer.2} parent=31 // loop_footer_branch
                %139 = sbr.rel target = $region34
              $region39: #{hca_layer.2} parent=31 // loop_exit
                _
            $region32: #{hca_layer.2} parent=23 // pred_fallthru
              _
          $region24: #{hca_layer.2} parent=19 // pred_fallthru
            _
          %191 = vnop
        $region20: #{hca_layer.2} parent=15 // pred_fallthru
          _
      $region16: #{hca_layer.2} parent=5 // pred_fallthru
        _
      %p192 = scmp.le.s32.totalorder 1, %s9
      %p193 = scmp.lt.s32.totalorder %s9, 5
      %p194 = pnand %p192, %p193
      %p195 = pneg %p194
      // Predicated region
      $region55: #{hca_layer.2} parent=5 // pred_check
        _
      $region56: #{hca_layer.2} parent=5 // pred_check_branch
        %197 = sbr.rel (%p194) target = $region58
      $region57: #{hca_layer.2} parent=5 // pred_region
        %s198 = ssub.s32 %s9, 1
        %s199 = sand.u32 %s36, 1
        %s200 = sand.u32 %s36, 1
        %s201 = smul.addr %s200, 64
        %s202 = scalar_lea.vmem [#allocation2], %s201
        // Predicated region
        $region59: #{hca_layer.2} parent=57 // pred_check
          %p203 = pneg %p49
        $region60: #{hca_layer.2} parent=57 // pred_check_branch
          %205 = sbr.rel (%p203) target = $region62
        $region61: #{hca_layer.2} parent=57 // pred_region
          _
        $region62: #{hca_layer.2} parent=57 // pred_fallthru
          _
        %s206 = sand.u32 %s36, 1
        %s207 = sand.u32 %s36, 1
        %s208 = smul.addr %s207, 64
        %s209 = scalar_lea.vmem [#allocation2], %s208
        %p210 = pneg %p49
        %p211 = pneg %p46
        %p212 = pneg %p75
        %p213 = pneg %p72
        %p214 = scmp.lt.s32.totalorder %s18, 1
        %s215 = scalar_select %p214, %s18, 1
        %s216 = smul.addr %s215, 8
        %s217 = smul.addr %s216, 8
        %s218 = scalar_lea.vmem %s1, %s217
        %p219 = pneg %p101
        %p220 = pneg %p98
        %p221 = scmp.lt.s32.totalorder %s18, 1
        %s222 = scalar_select %p221, %s18, 1
        %s223 = smul.addr %s222, 8
        %s224 = smul.addr %s223, 8
        %s225 = scalar_lea.vmem %s2, %s224
        %p226 = scmp.lt.s32.totalorder %s18, 1
        %s227 = scalar_select %p226, %s18, 1
        %s228 = smul.addr %s227, 8
        %s229 = smul.addr %s228, 8
        %s230 = scalar_lea.vmem %s1, %s229
        %p231 = scmp.lt.s32.totalorder %s18, 1
        %s232 = scalar_select %p231, %s18, 1
        %s233 = smul.addr %s232, 8
        %s234 = smul.addr %s233, 8
        %s235 = scalar_lea.vmem %s2, %s234
        %v236 = vld [vmem:[%s202] sm:$0xff]
        %v237 = vld [vmem:[%s202 + $0x8] sm:$0xff]
        %v238 = vld [vmem:[%s202 + $0x10] sm:$0xff]
        %v239 = vld [vmem:[%s202 + $0x18] sm:$0xff]
        %v240 = vld [vmem:[%s202 + $0x20] sm:$0xff]
        %v241 = vld [vmem:[%s202 + $0x28] sm:$0xff]
        %v242 = vld [vmem:[%s202 + $0x30] sm:$0xff]
        %v243 = vld [vmem:[%s202 + $0x38] sm:$0xff]
        %244 = vadd.xlane.f32.xlu0 %v236
        %v245 = vpop.xlane.xlu0 %244
        %246 = vadd.xlane.f32.xlu0 %v237
        %v247 = vpop.xlane.xlu0 %246
        %248 = vadd.xlane.f32.xlu0 %v238
        %v249 = vpop.xlane.xlu0 %248
        %250 = vadd.xlane.f32.xlu0 %v239
        %v251 = vpop.xlane.xlu0 %250
        %252 = vadd.xlane.f32.xlu0 %v240
        %v253 = vpop.xlane.xlu0 %252
        %254 = vadd.xlane.f32.xlu0 %v241
        %v255 = vpop.xlane.xlu0 %254
        %256 = vadd.xlane.f32.xlu0 %v242
        %v257 = vpop.xlane.xlu0 %256
        %258 = vadd.xlane.f32.xlu0 %v243
        %v259 = vpop.xlane.xlu0 %258
        %260 = vmax.xlane.f32.xlu0 %v236
        %v261 = vpop.xlane.xlu0 %260
        %262 = vmax.xlane.f32.xlu0 %v237
        %v263 = vpop.xlane.xlu0 %262
        %264 = vmax.xlane.f32.xlu0 %v238
        %v265 = vpop.xlane.xlu0 %264
        %266 = vmax.xlane.f32.xlu0 %v239
        %v267 = vpop.xlane.xlu0 %266
        %268 = vmax.xlane.f32.xlu0 %v240
        %v269 = vpop.xlane.xlu0 %268
        %270 = vmax.xlane.f32.xlu0 %v241
        %v271 = vpop.xlane.xlu0 %270
        %272 = vmax.xlane.f32.xlu0 %v242
        %v273 = vpop.xlane.xlu0 %272
        %274 = vmax.xlane.f32.xlu0 %v243
        %v275 = vpop.xlane.xlu0 %274
        %p276 = scmp.eq.s32.totalorder %s19, 0
        // Predicated region
        $region63: #{hca_layer.2} parent=57 // pred_check
          %p277 = pneg %p276
        $region64: #{hca_layer.2} parent=57 // pred_check_branch
          %279 = sbr.rel (%p277) target = $region66
        $region65: #{hca_layer.2} parent=57 // pred_region
          %vm280 = vcmask 7168
          %281 = vst.msk [vmem:[%s230] sm:$0xff] %vm280, %v245
          %282 = vst.msk [vmem:[%s230 + $0x8] sm:$0xff] %vm280, %v247
          %283 = vst.msk [vmem:[%s230 + $0x10] sm:$0xff] %vm280, %v249
          %284 = vst.msk [vmem:[%s230 + $0x18] sm:$0xff] %vm280, %v251
          %285 = vst.msk [vmem:[%s230 + $0x20] sm:$0xff] %vm280, %v253
          %286 = vst.msk [vmem:[%s230 + $0x28] sm:$0xff] %vm280, %v255
          %287 = vst.msk [vmem:[%s230 + $0x30] sm:$0xff] %vm280, %v257
          %288 = vst.msk [vmem:[%s230 + $0x38] sm:$0xff] %vm280, %v259
          %289 = vst.msk [vmem:[%s235] sm:$0xff] %vm280, %v261
          %290 = vst.msk [vmem:[%s235 + $0x8] sm:$0xff] %vm280, %v263
          %291 = vst.msk [vmem:[%s235 + $0x10] sm:$0xff] %vm280, %v265
          %292 = vst.msk [vmem:[%s235 + $0x18] sm:$0xff] %vm280, %v267
          %293 = vst.msk [vmem:[%s235 + $0x20] sm:$0xff] %vm280, %v269
          %294 = vst.msk [vmem:[%s235 + $0x28] sm:$0xff] %vm280, %v271
          %295 = vst.msk [vmem:[%s235 + $0x30] sm:$0xff] %vm280, %v273
          %296 = vst.msk [vmem:[%s235 + $0x38] sm:$0xff] %vm280, %v275
        $region66: #{hca_layer.2} parent=57 // pred_fallthru
          _
        %p297 = scmp.gt.s32.totalorder %s19, 0
        // Predicated region
        $region67: #{hca_layer.2} parent=57 // pred_check
          %p298 = pneg %p297
        $region68: #{hca_layer.2} parent=57 // pred_check_branch
          %300 = sbr.rel (%p298) target = $region70
        $region69: #{hca_layer.2} parent=57 // pred_region
          %v301 = vld [vmem:[%s230] sm:$0xff]
          %v302 = vld [vmem:[%s230 + $0x8] sm:$0xff]
          %v303 = vld [vmem:[%s230 + $0x10] sm:$0xff]
          %v304 = vld [vmem:[%s230 + $0x18] sm:$0xff]
          %v305 = vld [vmem:[%s230 + $0x20] sm:$0xff]
          %v306 = vld [vmem:[%s230 + $0x28] sm:$0xff]
          %v307 = vld [vmem:[%s230 + $0x30] sm:$0xff]
          %v308 = vld [vmem:[%s230 + $0x38] sm:$0xff]
          %v309 = vadd.f32 %v301, %v245
          %v310 = vadd.f32 %v302, %v247
          %v311 = vadd.f32 %v303, %v249
          %v312 = vadd.f32 %v304, %v251
          %v313 = vadd.f32 %v305, %v253
          %v314 = vadd.f32 %v306, %v255
          %v315 = vadd.f32 %v307, %v257
          %v316 = vadd.f32 %v308, %v259
          %vm317 = vcmask 7168
          %318 = vst.msk [vmem:[%s230] sm:$0xff] %vm317, %v309
          %319 = vst.msk [vmem:[%s230 + $0x8] sm:$0xff] %vm317, %v310
          %320 = vst.msk [vmem:[%s230 + $0x10] sm:$0xff] %vm317, %v311
          %321 = vst.msk [vmem:[%s230 + $0x18] sm:$0xff] %vm317, %v312
          %322 = vst.msk [vmem:[%s230 + $0x20] sm:$0xff] %vm317, %v313
          %323 = vst.msk [vmem:[%s230 + $0x28] sm:$0xff] %vm317, %v314
          %324 = vst.msk [vmem:[%s230 + $0x30] sm:$0xff] %vm317, %v315
          %325 = vst.msk [vmem:[%s230 + $0x38] sm:$0xff] %vm317, %v316
          %v326 = vld [vmem:[%s235] sm:$0xff]
          %v327 = vld [vmem:[%s235 + $0x8] sm:$0xff]
          %v328 = vld [vmem:[%s235 + $0x10] sm:$0xff]
          %v329 = vld [vmem:[%s235 + $0x18] sm:$0xff]
          %v330 = vld [vmem:[%s235 + $0x20] sm:$0xff]
          %v331 = vld [vmem:[%s235 + $0x28] sm:$0xff]
          %v332 = vld [vmem:[%s235 + $0x30] sm:$0xff]
          %v333 = vld [vmem:[%s235 + $0x38] sm:$0xff]
          %v334 = vmax.f32 %v326, %v261
          %v335 = vmax.f32 %v327, %v263
          %v336 = vmax.f32 %v328, %v265
          %v337 = vmax.f32 %v329, %v267
          %v338 = vmax.f32 %v330, %v269
          %v339 = vmax.f32 %v331, %v271
          %v340 = vmax.f32 %v332, %v273
          %v341 = vmax.f32 %v333, %v275
          %342 = vst.msk [vmem:[%s235] sm:$0xff] %vm317, %v334
          %343 = vst.msk [vmem:[%s235 + $0x8] sm:$0xff] %vm317, %v335
          %344 = vst.msk [vmem:[%s235 + $0x10] sm:$0xff] %vm317, %v336
          %345 = vst.msk [vmem:[%s235 + $0x18] sm:$0xff] %vm317, %v337
          %346 = vst.msk [vmem:[%s235 + $0x20] sm:$0xff] %vm317, %v338
          %347 = vst.msk [vmem:[%s235 + $0x28] sm:$0xff] %vm317, %v339
          %348 = vst.msk [vmem:[%s235 + $0x30] sm:$0xff] %vm317, %v340
          %349 = vst.msk [vmem:[%s235 + $0x38] sm:$0xff] %vm317, %v341
        $region70: #{hca_layer.2} parent=57 // pred_fallthru
          _
        %p350 = scmp.eq.s32.totalorder %s19, 1
        // Predicated region
        $region71: #{hca_layer.2} parent=57 // pred_check
          %p351 = pneg %p350
        $region72: #{hca_layer.2} parent=57 // pred_check_branch
          %353 = sbr.rel (%p351) target = $region74
        $region73: #{hca_layer.2} parent=57 // pred_region
          %v354 = vld [vmem:[%s230] sm:$0xff]
          %v355 = vld [vmem:[%s230 + $0x8] sm:$0xff]
          %v356 = vld [vmem:[%s230 + $0x10] sm:$0xff]
          %v357 = vld [vmem:[%s230 + $0x18] sm:$0xff]
          %v358 = vld [vmem:[%s230 + $0x20] sm:$0xff]
          %v359 = vld [vmem:[%s230 + $0x28] sm:$0xff]
          %v360 = vld [vmem:[%s230 + $0x30] sm:$0xff]
          %v361 = vld [vmem:[%s230 + $0x38] sm:$0xff]
          %v362 = vmul.f32 %v354, 0.00390625
          %v363 = vmul.f32 %v355, 0.00390625
          %v364 = vmul.f32 %v356, 0.00390625
          %v365 = vmul.f32 %v357, 0.00390625
          %v366 = vmul.f32 %v358, 0.00390625
          %v367 = vmul.f32 %v359, 0.00390625
          %v368 = vmul.f32 %v360, 0.00390625
          %v369 = vmul.f32 %v361, 0.00390625
          %vm370 = vcmask 7168
          %371 = vst.msk [vmem:[%s230] sm:$0xff] %vm370, %v362
          %372 = vst.msk [vmem:[%s230 + $0x8] sm:$0xff] %vm370, %v363
          %373 = vst.msk [vmem:[%s230 + $0x10] sm:$0xff] %vm370, %v364
          %374 = vst.msk [vmem:[%s230 + $0x18] sm:$0xff] %vm370, %v365
          %375 = vst.msk [vmem:[%s230 + $0x20] sm:$0xff] %vm370, %v366
          %376 = vst.msk [vmem:[%s230 + $0x28] sm:$0xff] %vm370, %v367
          %377 = vst.msk [vmem:[%s230 + $0x30] sm:$0xff] %vm370, %v368
          %378 = vst.msk [vmem:[%s230 + $0x38] sm:$0xff] %vm370, %v369
        $region74: #{hca_layer.2} parent=57 // pred_fallthru
          _
        %p379 = scmp.lt.s32.totalorder %s18, 1
        %s380 = scalar_select %p379, %s18, 1
        %s381 = smul.addr %s380, 8
        %s382 = smul.addr %s381, 8
        %s383 = scalar_lea.vmem %s1, %s382
        %p384 = scmp.lt.s32.totalorder %s18, 1
        %s385 = scalar_select %p384, %s18, 1
        %s386 = smul.addr %s385, 8
        %s387 = smul.addr %s386, 8
        %s388 = scalar_lea.vmem %s2, %s387
        // Predicated region
        $region75: #{hca_layer.2} parent=57 // pred_check
          %p389 = pneg %p72
        $region76: #{hca_layer.2} parent=57 // pred_check_branch
          %391 = sbr.rel (%p389) target = $region78
        $region77: #{hca_layer.2} parent=57 // pred_region
          _
        $region78: #{hca_layer.2} parent=57 // pred_fallthru
          _
        // Predicated region
        $region79: #{hca_layer.2} parent=57 // pred_check
          %p392 = pneg %p98
        $region80: #{hca_layer.2} parent=57 // pred_check_branch
          %394 = sbr.rel (%p392) target = $region82
        $region81: #{hca_layer.2} parent=57 // pred_region
          _
        $region82: #{hca_layer.2} parent=57 // pred_fallthru
          _
      $region58: #{hca_layer.2} parent=5 // pred_fallthru
        _
      %p395 = scmp.le.s32.totalorder 2, %s9
      // Predicated region
      $region83: #{hca_layer.2} parent=5 // pred_check
        %p396 = pneg %p395
      $region84: #{hca_layer.2} parent=5 // pred_check_branch
        %398 = sbr.rel (%p396) target = $region86
      $region85: #{hca_layer.2} parent=5 // pred_region
        %s399 = ssub.s32 %s9, 2
        // Predicated region
        $region87: #{hca_layer.2} parent=85 // pred_check
          %p400 = pneg %p78
        $region88: #{hca_layer.2} parent=85 // pred_check_branch
          %402 = sbr.rel (%p400) target = $region90
        $region89: #{hca_layer.2} parent=85 // pred_region
          %p403 = scmp.lt.s32.totalorder %s20, 1
          %s404 = scalar_select %p403, %s20, 1
          %s405 = smul.addr %s404, 8
          %s406 = smul.addr %s405, 8
          %s407 = scalar_lea.vmem %s1, %s406
        $region90: #{hca_layer.2} parent=85 // pred_fallthru
          _
        // Predicated region
        $region91: #{hca_layer.2} parent=85 // pred_check
          %p408 = pneg %p104
        $region92: #{hca_layer.2} parent=85 // pred_check_branch
          %410 = sbr.rel (%p408) target = $region94
        $region93: #{hca_layer.2} parent=85 // pred_region
          %p411 = scmp.lt.s32.totalorder %s20, 1
          %s412 = scalar_select %p411, %s20, 1
          %s413 = smul.addr %s412, 8
          %s414 = smul.addr %s413, 8
          %s415 = scalar_lea.vmem %s2, %s414
        $region94: #{hca_layer.2} parent=85 // pred_fallthru
          _
      $region86: #{hca_layer.2} parent=5 // pred_fallthru
        _
    $region6: #{hca_layer.2} parent=1 // loop_footer
      %s13 = sadd.s32 1, %s9
    $region7: #{hca_layer.2} parent=1 // loop_footer_branch
      %8 = sbr.rel target = $region3
    $region8: #{hca_layer.2} parent=1 // loop_exit
      _

// kernel: hca_layer.3
$region0: #{hca_layer.3}
  #allocation0 [shape = 'u32[]', space=smem, size = 0x4, offset = 0x4, fixed_abs, tag = 'smem constant byte address 0x4 - core index']
  #allocation1 [shape = 'u32[72,128]{1,0:T(1,128)}', space=vmem, size = 0x9000, scoped, tag = 'internal scratch']
  %s0 = inlined_call_operand.vmem [shape: f32[2,64,1], index: 0, kind: input, shape index: {}]
  %s1 = inlined_call_operand.vmem [shape: f32[2,64,256], index: 1, kind: input, shape index: {}]
  %s2 = inlined_call_operand.vmem [shape: f32[4,64], index: 2, kind: input, shape index: {}]
  %s3 = inlined_call_operand.vmem [shape: f32[4,1], index: 3, kind: input, shape index: {}]
  %s4 = inlined_call_operand.vmem [shape: f32[64,4], index: 4, kind: input, shape index: {}]
  %s5 = inlined_call_operand.vmem [shape: f32[64,1], index: 5, kind: input, shape index: {}]
  %s6 = inlined_call_operand.vmem [shape: f32[2,64,256], index: 6, kind: output, shape index: {}]
  %s7 = sld [smem:[#allocation0]]
  $region129: #{hca_layer.3} parent=0
    _
  %s9 = ssub.s32 1, %s7
  %s10 = scalar_select 0, %s9, %s7
  $region1: #{hca_layer.3} parent=0
    #allocation2 [shape = 'u8[65536]{0}', space=vmem, size = 0x10000, scoped, tag = 'input window, operand 1']
    #allocation3 [shape = 'u8[65536]{0}', space=vmem, size = 0x10000, scoped, tag = 'output window, operand 0']
    loop: start=0, step=1, limit=6
    $region2: #{hca_layer.3} parent=1 // loop_pre_header
      _
    $region3: #{hca_layer.3} parent=1 // loop_header
      %s12 = sphi 0, %s16
      %p13 = scmp.ge.s32.totalorder %s12, 6
      %s19 = sphi 0, %s31
      %s20 = sphi 0, %s27
      %s21 = sphi 0, %s19
      %s22 = sphi 0, %s20
      %s23 = sphi 0, %s21
      %s24 = sphi 0, %s22
      %s34 = sphi 0, %s36
      %s37 = sphi 0, %s34
      %s38 = sphi 0, %s37
      %s54 = sphi 0, %s38
      %s62 = sphi 0, %s64
      %s65 = sphi 0, %s62
      %s66 = sphi 0, %s65
      %s82 = sphi 0, %s66
      %s86 = sphi 0, %s86
      %s88 = sphi 0, %s86
      %s89 = sphi 0, %s88
      %s103 = sphi 0, %s89
      %s107 = sphi 0, %s107
      %s109 = sphi 0, %s107
      %s110 = sphi 0, %s109
      %s124 = sphi 0, %s110
      %s128 = sphi 0, %s128
      %s130 = sphi 0, %s128
      %s131 = sphi 0, %s130
      %s145 = sphi 0, %s131
      %s149 = sphi 0, %s149
      %s151 = sphi 0, %s149
      %s152 = sphi 0, %s151
      %s166 = sphi 0, %s152
      %s174 = sphi 0, %s176
      %s177 = sphi 0, %s174
      %s178 = sphi 0, %s177
      %s194 = sphi 0, %s178
    $region4: #{hca_layer.3} parent=1 // loop_header_branch
      %15 = sbr.rel (%p13) target = $region8
    $region5: #{hca_layer.3} parent=1 // loop_body
      %s17 = ssub.s32 %s12, 1
      %s18 = ssub.s32 %s12, 2
      %s25 = sadd.s32 1, %s20
      %p26 = scmp.ge.s32.totalorder %s25, 2
      %s27 = scalar_select %p26, 0, %s25
      %s28 = sadd.s32 1, %s19
      %s29 = scalar_select %p26, %s28, %s19
      %p30 = scmp.ge.s32.totalorder %s29, 2
      %s31 = scalar_select %p30, 0, %s29
      %s32 = ssub.s32 %s19, %s31
      %p33 = scmp.eq.s32.totalorder %s32, 0
      %s35 = sadd.s32 %s34, 1
      %s36 = scalar_select %p33, %s34, %s35
      %p39 = pneg %p33
      %p40 = scmp.eq.s32.totalorder %s12, 3
      %p41 = por %p39, %p40
      %p42 = scmp.ne.s32.totalorder %s34, %s37
      %p43 = scmp.eq.s32.totalorder %s12, 0
      %p44 = por %p42, %p43
      %p45 = scmp.ne.s32.totalorder %s34, %s37
      %p46 = scmp.eq.s32.totalorder %s17, 3
      %p47 = por %p45, %p46
      %p48 = scmp.ne.s32.totalorder %s37, %s38
      %p49 = scmp.eq.s32.totalorder %s17, 0
      %p50 = por %p48, %p49
      %p51 = scmp.ne.s32.totalorder %s37, %s38
      %p52 = scmp.eq.s32.totalorder %s18, 3
      %p53 = por %p51, %p52
      %p55 = scmp.ne.s32.totalorder %s38, %s54
      %p56 = scmp.eq.s32.totalorder %s18, 0
      %p57 = por %p55, %p56
      %s58 = ssub.s32 %s19, %s31
      %s59 = ssub.s32 %s20, %s27
      %s60 = sor.u32 %s58, %s59
      %p61 = scmp.eq.s32.totalorder %s60, 0
      %s63 = sadd.s32 %s62, 1
      %s64 = scalar_select %p61, %s62, %s63
      %p67 = pneg %p61
      %p68 = scmp.eq.s32.totalorder %s12, 3
      %p69 = por %p67, %p68
      %p70 = scmp.ne.s32.totalorder %s62, %s65
      %p71 = scmp.eq.s32.totalorder %s12, 0
      %p72 = por %p70, %p71
      %p73 = scmp.ne.s32.totalorder %s62, %s65
      %p74 = scmp.eq.s32.totalorder %s17, 3
      %p75 = por %p73, %p74
      %p76 = scmp.ne.s32.totalorder %s65, %s66
      %p77 = scmp.eq.s32.totalorder %s17, 0
      %p78 = por %p76, %p77
      %p79 = scmp.ne.s32.totalorder %s65, %s66
      %p80 = scmp.eq.s32.totalorder %s18, 3
      %p81 = por %p79, %p80
      %p83 = scmp.ne.s32.totalorder %s66, %s82
      %p84 = scmp.eq.s32.totalorder %s18, 0
      %p85 = por %p83, %p84
      %s87 = sadd.s32 %s86, 1
      %p90 = scmp.eq.s32.totalorder %s12, 3
      %p91 = scmp.ne.s32.totalorder %s86, %s88
      %p92 = scmp.eq.s32.totalorder %s12, 0
      %p93 = por %p91, %p92
      %p94 = scmp.ne.s32.totalorder %s86, %s88
      %p95 = scmp.eq.s32.totalorder %s17, 3
      %p96 = por %p94, %p95
      %p97 = scmp.ne.s32.totalorder %s88, %s89
      %p98 = scmp.eq.s32.totalorder %s17, 0
      %p99 = por %p97, %p98
      %p100 = scmp.ne.s32.totalorder %s88, %s89
      %p101 = scmp.eq.s32.totalorder %s18, 3
      %p102 = por %p100, %p101
      %p104 = scmp.ne.s32.totalorder %s89, %s103
      %p105 = scmp.eq.s32.totalorder %s18, 0
      %p106 = por %p104, %p105
      %s108 = sadd.s32 %s107, 1
      %p111 = scmp.eq.s32.totalorder %s12, 3
      %p112 = scmp.ne.s32.totalorder %s107, %s109
      %p113 = scmp.eq.s32.totalorder %s12, 0
      %p114 = por %p112, %p113
      %p115 = scmp.ne.s32.totalorder %s107, %s109
      %p116 = scmp.eq.s32.totalorder %s17, 3
      %p117 = por %p115, %p116
      %p118 = scmp.ne.s32.totalorder %s109, %s110
      %p119 = scmp.eq.s32.totalorder %s17, 0
      %p120 = por %p118, %p119
      %p121 = scmp.ne.s32.totalorder %s109, %s110
      %p122 = scmp.eq.s32.totalorder %s18, 3
      %p123 = por %p121, %p122
      %p125 = scmp.ne.s32.totalorder %s110, %s124
      %p126 = scmp.eq.s32.totalorder %s18, 0
      %p127 = por %p125, %p126
      %s129 = sadd.s32 %s128, 1
      %p132 = scmp.eq.s32.totalorder %s12, 3
      %p133 = scmp.ne.s32.totalorder %s128, %s130
      %p134 = scmp.eq.s32.totalorder %s12, 0
      %p135 = por %p133, %p134
      %p136 = scmp.ne.s32.totalorder %s128, %s130
      %p137 = scmp.eq.s32.totalorder %s17, 3
      %p138 = por %p136, %p137
      %p139 = scmp.ne.s32.totalorder %s130, %s131
      %p140 = scmp.eq.s32.totalorder %s17, 0
      %p141 = por %p139, %p140
      %p142 = scmp.ne.s32.totalorder %s130, %s131
      %p143 = scmp.eq.s32.totalorder %s18, 3
      %p144 = por %p142, %p143
      %p146 = scmp.ne.s32.totalorder %s131, %s145
      %p147 = scmp.eq.s32.totalorder %s18, 0
      %p148 = por %p146, %p147
      %s150 = sadd.s32 %s149, 1
      %p153 = scmp.eq.s32.totalorder %s12, 3
      %p154 = scmp.ne.s32.totalorder %s149, %s151
      %p155 = scmp.eq.s32.totalorder %s12, 0
      %p156 = por %p154, %p155
      %p157 = scmp.ne.s32.totalorder %s149, %s151
      %p158 = scmp.eq.s32.totalorder %s17, 3
      %p159 = por %p157, %p158
      %p160 = scmp.ne.s32.totalorder %s151, %s152
      %p161 = scmp.eq.s32.totalorder %s17, 0
      %p162 = por %p160, %p161
      %p163 = scmp.ne.s32.totalorder %s151, %s152
      %p164 = scmp.eq.s32.totalorder %s18, 3
      %p165 = por %p163, %p164
      %p167 = scmp.ne.s32.totalorder %s152, %s166
      %p168 = scmp.eq.s32.totalorder %s18, 0
      %p169 = por %p167, %p168
      %s170 = ssub.s32 %s19, %s31
      %s171 = ssub.s32 %s20, %s27
      %s172 = sor.u32 %s170, %s171
      %p173 = scmp.eq.s32.totalorder %s172, 0
      %s175 = sadd.s32 %s174, 1
      %s176 = scalar_select %p173, %s174, %s175
      %p179 = pneg %p173
      %p180 = scmp.eq.s32.totalorder %s12, 3
      %p181 = por %p179, %p180
      %p182 = scmp.ne.s32.totalorder %s174, %s177
      %p183 = scmp.eq.s32.totalorder %s12, 0
      %p184 = por %p182, %p183
      %p185 = scmp.ne.s32.totalorder %s174, %s177
      %p186 = scmp.eq.s32.totalorder %s17, 3
      %p187 = por %p185, %p186
      %p188 = scmp.ne.s32.totalorder %s177, %s178
      %p189 = scmp.eq.s32.totalorder %s17, 0
      %p190 = por %p188, %p189
      %p191 = scmp.ne.s32.totalorder %s177, %s178
      %p192 = scmp.eq.s32.totalorder %s18, 3
      %p193 = por %p191, %p192
      %p195 = scmp.ne.s32.totalorder %s178, %s194
      %p196 = scmp.eq.s32.totalorder %s18, 0
      %p197 = por %p195, %p196
      %p198 = scmp.le.s32.totalorder 1, %s12
      %p199 = scmp.lt.s32.totalorder %s12, 5
      %p200 = pnand %p198, %p199
      %p201 = pneg %p200
      // Predicated region
      $region9: #{hca_layer.3} parent=5 // pred_check
        _
      $region10: #{hca_layer.3} parent=5 // pred_check_branch
        %203 = sbr.rel (%p200) target = $region12
      $region11: #{hca_layer.3} parent=5 // pred_region
        %s204 = ssub.s32 %s12, 1
        // Predicated region
        $region13: #{hca_layer.3} parent=11 // pred_check
          %p205 = pneg %p99
        $region14: #{hca_layer.3} parent=11 // pred_check_branch
          %207 = sbr.rel (%p205) target = $region16
        $region15: #{hca_layer.3} parent=11 // pred_region
          _
        $region16: #{hca_layer.3} parent=11 // pred_fallthru
          _
        // Predicated region
        $region17: #{hca_layer.3} parent=11 // pred_check
          %p208 = pneg %p120
        $region18: #{hca_layer.3} parent=11 // pred_check_branch
          %210 = sbr.rel (%p208) target = $region20
        $region19: #{hca_layer.3} parent=11 // pred_region
          _
        $region20: #{hca_layer.3} parent=11 // pred_fallthru
          _
        // Predicated region
        $region21: #{hca_layer.3} parent=11 // pred_check
          %p211 = pneg %p141
        $region22: #{hca_layer.3} parent=11 // pred_check_branch
          %213 = sbr.rel (%p211) target = $region24
        $region23: #{hca_layer.3} parent=11 // pred_region
          _
        $region24: #{hca_layer.3} parent=11 // pred_fallthru
          _
        // Predicated region
        $region25: #{hca_layer.3} parent=11 // pred_check
          %p214 = pneg %p162
        $region26: #{hca_layer.3} parent=11 // pred_check_branch
          %216 = sbr.rel (%p214) target = $region28
        $region27: #{hca_layer.3} parent=11 // pred_region
          _
        $region28: #{hca_layer.3} parent=11 // pred_fallthru
          _
      $region12: #{hca_layer.3} parent=5 // pred_fallthru
        _
      %p217 = scmp.lt.s32.totalorder %s12, 4
      // Predicated region
      $region29: #{hca_layer.3} parent=5 // pred_check
        %p218 = pneg %p217
      $region30: #{hca_layer.3} parent=5 // pred_check_branch
        %220 = sbr.rel (%p218) target = $region32
      $region31: #{hca_layer.3} parent=5 // pred_region
        // Predicated region
        $region33: #{hca_layer.3} parent=31 // pred_check
          %p221 = pneg %p44
        $region34: #{hca_layer.3} parent=31 // pred_check_branch
          %223 = sbr.rel (%p221) target = $region36
        $region35: #{hca_layer.3} parent=31 // pred_region
          %p224 = scmp.lt.s32.totalorder %s19, 1
          %s225 = scalar_select %p224, %s19, 1
          %s226 = smul.addr %s225, 8
          %s227 = smul.addr %s226, 8
          %s228 = scalar_lea.vmem %s0, %s227
        $region36: #{hca_layer.3} parent=31 // pred_fallthru
          _
        // Predicated region
        $region37: #{hca_layer.3} parent=31 // pred_check
          %p229 = pneg %p72
        $region38: #{hca_layer.3} parent=31 // pred_check_branch
          %231 = sbr.rel (%p229) target = $region40
        $region39: #{hca_layer.3} parent=31 // pred_region
          %s232 = sand.u32 %s62, 1
          %s233 = sand.u32 %s62, 1
          %s234 = smul.addr %s233, 64
          %s235 = scalar_lea.vmem [#allocation2], %s234
          %s236 = smul.addr %s19, 16
          %s237 = sadd.s32 %s20, %s236
          %s238 = smul.addr %s237, 8
          %s239 = scalar_lea.vmem %s1, %s238
          // Predicated region
          $region41: #{hca_layer.3} parent=39 // pred_check
            _
          $region42: #{hca_layer.3} parent=39 // pred_check_branch
            %241 = sbr.rel (0) target = $region44
          $region43: #{hca_layer.3} parent=39 // pred_region
            // Predicated region
            $region45: #{hca_layer.3} parent=43 // pred_check
              _
            $region46: #{hca_layer.3} parent=43 // pred_check_branch
              %243 = sbr.rel (0) target = $region48
            $region47: #{hca_layer.3} parent=43 // pred_region
              // Predicated region
              $region60: #{hca_layer.3} parent=47 // pred_check
                _
              $region61: #{hca_layer.3} parent=47 // pred_check_branch
                %273 = sbr.rel (0) target = $region63
              $region62: #{hca_layer.3} parent=47 // pred_region
                loop: start=0, step=1, limit=1
                $region64: #{hca_layer.3} parent=62 // loop_pre_header
                  _
                $region65: #{hca_layer.3} parent=62 // loop_header
                  %s275 = sphi 0, %s279
                  %p276 = scmp.ge.s32.totalorder %s275, 1
                  %s280 = sphi %s239, %s239
                  %s281 = sphi %s235, %s235
                $region66: #{hca_layer.3} parent=62 // loop_header_branch
                  %278 = sbr.rel (%p276) target = $region70
                $region67: #{hca_layer.3} parent=62 // loop_body
                  %v282 = vld [vmem:[%s280] sm:$0xff]
                  %283 = vst [vmem:[%s281] sm:$0xff] %v282
                  %v284 = vld [vmem:[%s280 + $0x10] sm:$0xff]
                  %285 = vst [vmem:[%s281 + $0x8] sm:$0xff] %v284
                  %v286 = vld [vmem:[%s280 + $0x20] sm:$0xff]
                  %287 = vst [vmem:[%s281 + $0x10] sm:$0xff] %v286
                  %v288 = vld [vmem:[%s280 + $0x30] sm:$0xff]
                  %289 = vst [vmem:[%s281 + $0x18] sm:$0xff] %v288
                  %v290 = vld [vmem:[%s280 + $0x40] sm:$0xff]
                  %291 = vst [vmem:[%s281 + $0x20] sm:$0xff] %v290
                  %v292 = vld [vmem:[%s280 + $0x50] sm:$0xff]
                  %293 = vst [vmem:[%s281 + $0x28] sm:$0xff] %v292
                  %v294 = vld [vmem:[%s280 + $0x60] sm:$0xff]
                  %295 = vst [vmem:[%s281 + $0x30] sm:$0xff] %v294
                  %v296 = vld [vmem:[%s280 + $0x70] sm:$0xff]
                  %297 = vst [vmem:[%s281 + $0x38] sm:$0xff] %v296
                $region68: #{hca_layer.3} parent=62 // loop_footer
                  %s279 = sadd.s32 1, %s275
                $region69: #{hca_layer.3} parent=62 // loop_footer_branch
                  %274 = sbr.rel target = $region65
                $region70: #{hca_layer.3} parent=62 // loop_exit
                  _
              $region63: #{hca_layer.3} parent=47 // pred_fallthru
                _
              // Predicated region
              $region71: #{hca_layer.3} parent=47 // pred_check
                _
              $region72: #{hca_layer.3} parent=47 // pred_check_branch
                %299 = sbr.rel target = $region74
              $region73: #{hca_layer.3} parent=47 // pred_region
                _
              $region74: #{hca_layer.3} parent=47 // pred_fallthru
                _
            $region48: #{hca_layer.3} parent=43 // pred_fallthru
              _
            // Predicated region
            $region49: #{hca_layer.3} parent=43 // pred_check
              _
            $region50: #{hca_layer.3} parent=43 // pred_check_branch
              %245 = sbr.rel target = $region52
            $region51: #{hca_layer.3} parent=43 // pred_region
              %s247 = ssub.s32 256, 1
              loop: start=0, step=1, limit=1
              $region53: #{hca_layer.3} parent=51 // loop_pre_header
                _
              $region54: #{hca_layer.3} parent=51 // loop_header
                %s249 = sphi 0, %s253
                %p250 = scmp.ge.s32.totalorder %s249, 1
                %s254 = sphi %s239, %s239
                %s255 = sphi %s235, %s235
              $region55: #{hca_layer.3} parent=51 // loop_header_branch
                %252 = sbr.rel (%p250) target = $region59
              $region56: #{hca_layer.3} parent=51 // loop_body
                %v256 = vld [vmem:[%s254] sm:%s247]
                %257 = vst [vmem:[%s255] sm:%s247] %v256
                %v258 = vld [vmem:[%s254 + $0x10] sm:%s247]
                %259 = vst [vmem:[%s255 + $0x8] sm:%s247] %v258
                %v260 = vld [vmem:[%s254 + $0x20] sm:%s247]
                %261 = vst [vmem:[%s255 + $0x10] sm:%s247] %v260
                %v262 = vld [vmem:[%s254 + $0x30] sm:%s247]
                %263 = vst [vmem:[%s255 + $0x18] sm:%s247] %v262
                %v264 = vld [vmem:[%s254 + $0x40] sm:%s247]
                %265 = vst [vmem:[%s255 + $0x20] sm:%s247] %v264
                %v266 = vld [vmem:[%s254 + $0x50] sm:%s247]
                %267 = vst [vmem:[%s255 + $0x28] sm:%s247] %v266
                %v268 = vld [vmem:[%s254 + $0x60] sm:%s247]
                %269 = vst [vmem:[%s255 + $0x30] sm:%s247] %v268
                %v270 = vld [vmem:[%s254 + $0x70] sm:%s247]
                %271 = vst [vmem:[%s255 + $0x38] sm:%s247] %v270
              $region57: #{hca_layer.3} parent=51 // loop_footer
                %s253 = sadd.s32 1, %s249
              $region58: #{hca_layer.3} parent=51 // loop_footer_branch
                %248 = sbr.rel target = $region54
              $region59: #{hca_layer.3} parent=51 // loop_exit
                _
            $region52: #{hca_layer.3} parent=43 // pred_fallthru
              _
          $region44: #{hca_layer.3} parent=39 // pred_fallthru
            _
          %300 = vnop
        $region40: #{hca_layer.3} parent=31 // pred_fallthru
          _
      $region32: #{hca_layer.3} parent=5 // pred_fallthru
        _
      %p301 = scmp.le.s32.totalorder 1, %s12
      %p302 = scmp.lt.s32.totalorder %s12, 5
      %p303 = pnand %p301, %p302
      %p304 = pneg %p303
      // Predicated region
      $region75: #{hca_layer.3} parent=5 // pred_check
        _
      $region76: #{hca_layer.3} parent=5 // pred_check_branch
        %306 = sbr.rel (%p303) target = $region78
      $region77: #{hca_layer.3} parent=5 // pred_region
        %s307 = ssub.s32 %s12, 1
        %s308 = sand.u32 %s65, 1
        %s309 = sand.u32 %s65, 1
        %s310 = smul.addr %s309, 64
        %s311 = scalar_lea.vmem [#allocation2], %s310
        // Predicated region
        $region79: #{hca_layer.3} parent=77 // pred_check
          %p312 = pneg %p78
        $region80: #{hca_layer.3} parent=77 // pred_check_branch
          %314 = sbr.rel (%p312) target = $region82
        $region81: #{hca_layer.3} parent=77 // pred_region
          _
        $region82: #{hca_layer.3} parent=77 // pred_fallthru
          _
        %p315 = scmp.lt.s32.totalorder %s21, 1
        %s316 = scalar_select %p315, %s21, 1
        %s317 = smul.addr %s316, 8
        %s318 = smul.addr %s317, 8
        %s319 = scalar_lea.vmem %s0, %s318
        %p320 = pneg %p50
        %p321 = pneg %p47
        %s322 = sand.u32 %s65, 1
        %s323 = sand.u32 %s65, 1
        %s324 = smul.addr %s323, 64
        %s325 = scalar_lea.vmem [#allocation2], %s324
        %p326 = pneg %p78
        %p327 = pneg %p75
        %p328 = pneg %p99
        %p329 = pneg %p96
        %p330 = pneg %p120
        %p331 = pneg %p117
        %p332 = pneg %p141
        %p333 = pneg %p138
        %p334 = pneg %p162
        %p335 = pneg %p159
        %p336 = pneg %p190
        %p337 = pneg %p187
        %s338 = sand.u32 %s177, 1
        %s339 = sand.u32 %s177, 1
        %s340 = smul.addr %s339, 64
        %s341 = scalar_lea.vmem [#allocation3], %s340
        %p342 = scmp.lt.s32.totalorder %s21, 1
        %s343 = scalar_select %p342, %s21, 1
        %s344 = smul.addr %s343, 8
        %s345 = smul.addr %s344, 8
        %s346 = scalar_lea.vmem %s0, %s345
        %v347 = vld [vmem:[%s311] sm:$0xff]
        %v348 = vld [vmem:[%s311 + $0x8] sm:$0xff]
        %v349 = vld [vmem:[%s311 + $0x10] sm:$0xff]
        %v350 = vld [vmem:[%s311 + $0x18] sm:$0xff]
        %v351 = vld [vmem:[%s311 + $0x20] sm:$0xff]
        %v352 = vld [vmem:[%s311 + $0x28] sm:$0xff]
        %v353 = vld [vmem:[%s311 + $0x30] sm:$0xff]
        %v354 = vld [vmem:[%s311 + $0x38] sm:$0xff]
        %v355 = vld [vmem:[%s2] sm:$0xf]
        %v356 = vld [vmem:[%s3] sm:$0xf]
        %358 = vset.pattern.permute.xlu0 0
        %359 = vperm.xlu0 %358, %v356
        %v360 = vpop.permute.xlu0 %359
        %vm362 = vcmask 523264
        %v364 = vsel %vm362, %v355, 0
        %366 = vmatpush.msra.mxu0 0.0
        %367 = vmatpush.msra.mxu0 0.0
        %368 = vmatpush.msra.mxu0 0.0
        %369 = vmatpush.msra.mxu0 0.0
        %370 = vmatpush.msra.mxu0 0.0
        %371 = vmatpush.msra.mxu0 0.0
        %372 = vmatpush.msra.mxu0 0.0
        %373 = vmatpush.msra.mxu0 0.0
        %374 = vmatpush.msra.mxu0 %v354
        %375 = vmatpush.msra.mxu0 %v353
        %376 = vmatpush.msra.mxu0 %v352
        %377 = vmatpush.msra.mxu0 %v351
        %378 = vmatpush.msra.mxu0 %v350
        %379 = vmatpush.msra.mxu0 %v349
        %380 = vmatpush.msra.mxu0 %v348
        %381 = vmatpush.msra.mxu0 %v347
        %382 = vmatmul.f32.gmra.mxu0 %v364
        %v383 = vpop.f32.mrf.mxu0
        %v384 = vadd.f32 %v360, %v383
        %385 = vdwg.mxu0
        %v386 = vmax.f32 %v384, 0.0
        %v387 = vld [vmem:[%s4] sm:$0xff]
        %v388 = vld [vmem:[%s4 + $0x8] sm:$0xff]
        %v389 = vld [vmem:[%s4 + $0x10] sm:$0xff]
        %v390 = vld [vmem:[%s4 + $0x18] sm:$0xff]
        %v391 = vld [vmem:[%s4 + $0x20] sm:$0xff]
        %v392 = vld [vmem:[%s4 + $0x28] sm:$0xff]
        %v393 = vld [vmem:[%s4 + $0x30] sm:$0xff]
        %v394 = vld [vmem:[%s4 + $0x38] sm:$0xff]
        %v395 = vld [vmem:[%s5] sm:$0xff]
        %v396 = vld [vmem:[%s5 + $0x8] sm:$0xff]
        %v397 = vld [vmem:[%s5 + $0x10] sm:$0xff]
        %v398 = vld [vmem:[%s5 + $0x18] sm:$0xff]
        %v399 = vld [vmem:[%s5 + $0x20] sm:$0xff]
        %v400 = vld [vmem:[%s5 + $0x28] sm:$0xff]
        %v401 = vld [vmem:[%s5 + $0x30] sm:$0xff]
        %v402 = vld [vmem:[%s5 + $0x38] sm:$0xff]
        %404 = vset.pattern.permute.xlu0 0
        %405 = vperm.xlu0 %404, %v395
        %v406 = vpop.permute.xlu0 %405
        %409 = vset.pattern.permute.xlu0 0
        %410 = vperm.xlu0 %409, %v396
        %v411 = vpop.permute.xlu0 %410
        %414 = vset.pattern.permute.xlu0 0
        %415 = vperm.xlu0 %414, %v397
        %v416 = vpop.permute.xlu0 %415
        %419 = vset.pattern.permute.xlu0 0
        %420 = vperm.xlu0 %419, %v398
        %v421 = vpop.permute.xlu0 %420
        %424 = vset.pattern.permute.xlu0 0
        %425 = vperm.xlu0 %424, %v399
        %v426 = vpop.permute.xlu0 %425
        %429 = vset.pattern.permute.xlu0 0
        %430 = vperm.xlu0 %429, %v400
        %v431 = vpop.permute.xlu0 %430
        %434 = vset.pattern.permute.xlu0 0
        %435 = vperm.xlu0 %434, %v401
        %v436 = vpop.permute.xlu0 %435
        %439 = vset.pattern.permute.xlu0 0
        %440 = vperm.xlu0 %439, %v402
        %v441 = vpop.permute.xlu0 %440
        %vm443 = vcmask 31744
        %v445 = vsel %vm443, %v387, 0
        %v448 = vsel %vm443, %v388, 0
        %v451 = vsel %vm443, %v389, 0
        %v454 = vsel %vm443, %v390, 0
        %v457 = vsel %vm443, %v391, 0
        %v460 = vsel %vm443, %v392, 0
        %v463 = vsel %vm443, %v393, 0
        %v466 = vsel %vm443, %v394, 0
        %vm468 = vcmask 1043456
        %v470 = vsel %vm468, %v386, 0
        %472 = vmatpush.msra.mxu0 0.0
        %473 = vmatpush.msra.mxu0 0.0
        %474 = vmatpush.msra.mxu0 0.0
        %475 = vmatpush.msra.mxu0 0.0
        %476 = vmatpush.msra.mxu0 0.0
        %477 = vmatpush.msra.mxu0 0.0
        %478 = vmatpush.msra.mxu0 0.0
        %479 = vmatpush.msra.mxu0 0.0
        %480 = vmatpush.msra.mxu0 0.0
        %481 = vmatpush.msra.mxu0 0.0
        %482 = vmatpush.msra.mxu0 0.0
        %483 = vmatpush.msra.mxu0 0.0
        %484 = vmatpush.msra.mxu0 0.0
        %485 = vmatpush.msra.mxu0 0.0
        %486 = vmatpush.msra.mxu0 0.0
        %487 = vmatpush.msra.mxu0 %v470
        %488 = vmatmul.f32.gmra.mxu0 %v445
        %v489 = vpop.f32.mrf.mxu0
        %v490 = vadd.f32 %v406, %v489
        %491 = vmatmul.f32.gmra.mxu0 %v448
        %v492 = vpop.f32.mrf.mxu0
        %v493 = vadd.f32 %v411, %v492
        %494 = vmatmul.f32.gmra.mxu0 %v451
        %v495 = vpop.f32.mrf.mxu0
        %v496 = vadd.f32 %v416, %v495
        %497 = vmatmul.f32.gmra.mxu0 %v454
        %v498 = vpop.f32.mrf.mxu0
        %v499 = vadd.f32 %v421, %v498
        %500 = vmatmul.f32.gmra.mxu0 %v457
        %v501 = vpop.f32.mrf.mxu0
        %v502 = vadd.f32 %v426, %v501
        %503 = vmatmul.f32.gmra.mxu0 %v460
        %v504 = vpop.f32.mrf.mxu0
        %v505 = vadd.f32 %v431, %v504
        %506 = vmatmul.f32.gmra.mxu0 %v463
        %v507 = vpop.f32.mrf.mxu0
        %v508 = vadd.f32 %v436, %v507
        %509 = vmatmul.f32.gmra.mxu0 %v466
        %v510 = vpop.f32.mrf.mxu0
        %v511 = vadd.f32 %v441, %v510
        %512 = vdwg.mxu0
        %v513 = vsub.f32 0.0, %v490
        %v514 = vsub.f32 0.0, %v493
        %v515 = vsub.f32 0.0, %v496
        %v516 = vsub.f32 0.0, %v499
        %v517 = vsub.f32 0.0, %v502
        %v518 = vsub.f32 0.0, %v505
        %v519 = vsub.f32 0.0, %v508
        %v520 = vsub.f32 0.0, %v511
        %v521 = vmul.f32 %v513, 1.442695
        %v522 = vpow.pop %v521
        %v523 = vmul.f32 %v514, 1.442695
        %v524 = vpow.pop %v523
        %v525 = vmul.f32 %v515, 1.442695
        %v526 = vpow.pop %v525
        %v527 = vmul.f32 %v516, 1.442695
        %v528 = vpow.pop %v527
        %v529 = vmul.f32 %v517, 1.442695
        %v530 = vpow.pop %v529
        %v531 = vmul.f32 %v518, 1.442695
        %v532 = vpow.pop %v531
        %v533 = vmul.f32 %v519, 1.442695
        %v534 = vpow.pop %v533
        %v535 = vmul.f32 %v520, 1.442695
        %v536 = vpow.pop %v535
        %v537 = vadd.f32 %v522, 1.0
        %v538 = vadd.f32 %v524, 1.0
        %v539 = vadd.f32 %v526, 1.0
        %v540 = vadd.f32 %v528, 1.0
        %v541 = vadd.f32 %v530, 1.0
        %v542 = vadd.f32 %v532, 1.0
        %v543 = vadd.f32 %v534, 1.0
        %v544 = vadd.f32 %v536, 1.0
        %v545 = vrcp.pop %v537
        %v546 = vrcp.pop %v538
        %v547 = vrcp.pop %v539
        %v548 = vrcp.pop %v540
        %v549 = vrcp.pop %v541
        %v550 = vrcp.pop %v542
        %v551 = vrcp.pop %v543
        %v552 = vrcp.pop %v544
        %v553 = vld [vmem:[%s346] sm:$0xff]
        %v554 = vld [vmem:[%s346 + $0x8] sm:$0xff]
        %v555 = vld [vmem:[%s346 + $0x10] sm:$0xff]
        %v556 = vld [vmem:[%s346 + $0x18] sm:$0xff]
        %v557 = vld [vmem:[%s346 + $0x20] sm:$0xff]
        %v558 = vld [vmem:[%s346 + $0x28] sm:$0xff]
        %v559 = vld [vmem:[%s346 + $0x30] sm:$0xff]
        %v560 = vld [vmem:[%s346 + $0x38] sm:$0xff]
        %562 = vset.pattern.permute.xlu0 0
        %563 = vperm.xlu0 %562, %v553
        %v564 = vpop.permute.xlu0 %563
        %567 = vset.pattern.permute.xlu0 0
        %568 = vperm.xlu0 %567, %v554
        %v569 = vpop.permute.xlu0 %568
        %572 = vset.pattern.permute.xlu0 0
        %573 = vperm.xlu0 %572, %v555
        %v574 = vpop.permute.xlu0 %573
        %577 = vset.pattern.permute.xlu0 0
        %578 = vperm.xlu0 %577, %v556
        %v579 = vpop.permute.xlu0 %578
        %582 = vset.pattern.permute.xlu0 0
        %583 = vperm.xlu0 %582, %v557
        %v584 = vpop.permute.xlu0 %583
        %587 = vset.pattern.permute.xlu0 0
        %588 = vperm.xlu0 %587, %v558
        %v589 = vpop.permute.xlu0 %588
        %592 = vset.pattern.permute.xlu0 0
        %593 = vperm.xlu0 %592, %v559
        %v594 = vpop.permute.xlu0 %593
        %597 = vset.pattern.permute.xlu0 0
        %598 = vperm.xlu0 %597, %v560
        %v599 = vpop.permute.xlu0 %598
        %v601 = vadd.f32 %v545, %v564
        %v602 = vadd.f32 %v546, %v569
        %v603 = vadd.f32 %v547, %v574
        %v604 = vadd.f32 %v548, %v579
        %v605 = vadd.f32 %v549, %v584
        %v606 = vadd.f32 %v550, %v589
        %v607 = vadd.f32 %v551, %v594
        %v608 = vadd.f32 %v552, %v599
        %v609 = vmul.f32 %v347, %v601
        %v610 = vmul.f32 %v348, %v602
        %v611 = vmul.f32 %v349, %v603
        %v612 = vmul.f32 %v350, %v604
        %v613 = vmul.f32 %v351, %v605
        %v614 = vmul.f32 %v352, %v606
        %v615 = vmul.f32 %v353, %v607
        %v616 = vmul.f32 %v354, %v608
        %617 = vst [vmem:[%s341] sm:$0xff] %v609
        %618 = vst [vmem:[%s341 + $0x8] sm:$0xff] %v610
        %619 = vst [vmem:[%s341 + $0x10] sm:$0xff] %v611
        %620 = vst [vmem:[%s341 + $0x18] sm:$0xff] %v612
        %621 = vst [vmem:[%s341 + $0x20] sm:$0xff] %v613
        %622 = vst [vmem:[%s341 + $0x28] sm:$0xff] %v614
        %623 = vst [vmem:[%s341 + $0x30] sm:$0xff] %v615
        %624 = vst [vmem:[%s341 + $0x38] sm:$0xff] %v616
        %s625 = sand.u32 %s177, 1
        %s626 = sand.u32 %s177, 1
        %s627 = smul.addr %s626, 64
        %s628 = scalar_lea.vmem [#allocation3], %s627
        // Predicated region
        $region83: #{hca_layer.3} parent=77 // pred_check
          %p629 = pneg %p187
        $region84: #{hca_layer.3} parent=77 // pred_check_branch
          %631 = sbr.rel (%p629) target = $region86
        $region85: #{hca_layer.3} parent=77 // pred_region
          %s632 = smul.addr %s21, 16
          %s633 = sadd.s32 %s22, %s632
          %s634 = smul.addr %s633, 8
          %s635 = scalar_lea.vmem %s6, %s634
          // Predicated region
          $region87: #{hca_layer.3} parent=85 // pred_check
            _
          $region88: #{hca_layer.3} parent=85 // pred_check_branch
            %637 = sbr.rel (0) target = $region90
          $region89: #{hca_layer.3} parent=85 // pred_region
            // Predicated region
            $region91: #{hca_layer.3} parent=89 // pred_check
              _
            $region92: #{hca_layer.3} parent=89 // pred_check_branch
              %639 = sbr.rel (0) target = $region94
            $region93: #{hca_layer.3} parent=89 // pred_region
              // Predicated region
              $region106: #{hca_layer.3} parent=93 // pred_check
                _
              $region107: #{hca_layer.3} parent=93 // pred_check_branch
                %669 = sbr.rel (0) target = $region109
              $region108: #{hca_layer.3} parent=93 // pred_region
                loop: start=0, step=1, limit=1
                $region110: #{hca_layer.3} parent=108 // loop_pre_header
                  _
                $region111: #{hca_layer.3} parent=108 // loop_header
                  %s671 = sphi 0, %s675
                  %p672 = scmp.ge.s32.totalorder %s671, 1
                  %s676 = sphi %s628, %s628
                  %s677 = sphi %s635, %s635
                $region112: #{hca_layer.3} parent=108 // loop_header_branch
                  %674 = sbr.rel (%p672) target = $region116
                $region113: #{hca_layer.3} parent=108 // loop_body
                  %v678 = vld [vmem:[%s676] sm:$0xff]
                  %679 = vst [vmem:[%s677] sm:$0xff] %v678
                  %v680 = vld [vmem:[%s676 + $0x8] sm:$0xff]
                  %681 = vst [vmem:[%s677 + $0x10] sm:$0xff] %v680
                  %v682 = vld [vmem:[%s676 + $0x10] sm:$0xff]
                  %683 = vst [vmem:[%s677 + $0x20] sm:$0xff] %v682
                  %v684 = vld [vmem:[%s676 + $0x18] sm:$0xff]
                  %685 = vst [vmem:[%s677 + $0x30] sm:$0xff] %v684
                  %v686 = vld [vmem:[%s676 + $0x20] sm:$0xff]
                  %687 = vst [vmem:[%s677 + $0x40] sm:$0xff] %v686
                  %v688 = vld [vmem:[%s676 + $0x28] sm:$0xff]
                  %689 = vst [vmem:[%s677 + $0x50] sm:$0xff] %v688
                  %v690 = vld [vmem:[%s676 + $0x30] sm:$0xff]
                  %691 = vst [vmem:[%s677 + $0x60] sm:$0xff] %v690
                  %v692 = vld [vmem:[%s676 + $0x38] sm:$0xff]
                  %693 = vst [vmem:[%s677 + $0x70] sm:$0xff] %v692
                $region114: #{hca_layer.3} parent=108 // loop_footer
                  %s675 = sadd.s32 1, %s671
                $region115: #{hca_layer.3} parent=108 // loop_footer_branch
                  %670 = sbr.rel target = $region111
                $region116: #{hca_layer.3} parent=108 // loop_exit
                  _
              $region109: #{hca_layer.3} parent=93 // pred_fallthru
                _
              // Predicated region
              $region117: #{hca_layer.3} parent=93 // pred_check
                _
              $region118: #{hca_layer.3} parent=93 // pred_check_branch
                %695 = sbr.rel target = $region120
              $region119: #{hca_layer.3} parent=93 // pred_region
                _
              $region120: #{hca_layer.3} parent=93 // pred_fallthru
                _
            $region94: #{hca_layer.3} parent=89 // pred_fallthru
              _
            // Predicated region
            $region95: #{hca_layer.3} parent=89 // pred_check
              _
            $region96: #{hca_layer.3} parent=89 // pred_check_branch
              %641 = sbr.rel target = $region98
            $region97: #{hca_layer.3} parent=89 // pred_region
              %s643 = ssub.s32 256, 1
              loop: start=0, step=1, limit=1
              $region99: #{hca_layer.3} parent=97 // loop_pre_header
                _
              $region100: #{hca_layer.3} parent=97 // loop_header
                %s645 = sphi 0, %s649
                %p646 = scmp.ge.s32.totalorder %s645, 1
                %s650 = sphi %s628, %s628
                %s651 = sphi %s635, %s635
              $region101: #{hca_layer.3} parent=97 // loop_header_branch
                %648 = sbr.rel (%p646) target = $region105
              $region102: #{hca_layer.3} parent=97 // loop_body
                %v652 = vld [vmem:[%s650] sm:%s643]
                %653 = vst [vmem:[%s651] sm:%s643] %v652
                %v654 = vld [vmem:[%s650 + $0x8] sm:%s643]
                %655 = vst [vmem:[%s651 + $0x10] sm:%s643] %v654
                %v656 = vld [vmem:[%s650 + $0x10] sm:%s643]
                %657 = vst [vmem:[%s651 + $0x20] sm:%s643] %v656
                %v658 = vld [vmem:[%s650 + $0x18] sm:%s643]
                %659 = vst [vmem:[%s651 + $0x30] sm:%s643] %v658
                %v660 = vld [vmem:[%s650 + $0x20] sm:%s643]
                %661 = vst [vmem:[%s651 + $0x40] sm:%s643] %v660
                %v662 = vld [vmem:[%s650 + $0x28] sm:%s643]
                %663 = vst [vmem:[%s651 + $0x50] sm:%s643] %v662
                %v664 = vld [vmem:[%s650 + $0x30] sm:%s643]
                %665 = vst [vmem:[%s651 + $0x60] sm:%s643] %v664
                %v666 = vld [vmem:[%s650 + $0x38] sm:%s643]
                %667 = vst [vmem:[%s651 + $0x70] sm:%s643] %v666
              $region103: #{hca_layer.3} parent=97 // loop_footer
                %s649 = sadd.s32 1, %s645
              $region104: #{hca_layer.3} parent=97 // loop_footer_branch
                %644 = sbr.rel target = $region100
              $region105: #{hca_layer.3} parent=97 // loop_exit
                _
            $region98: #{hca_layer.3} parent=89 // pred_fallthru
              _
          $region90: #{hca_layer.3} parent=85 // pred_fallthru
            _
          %696 = vnop
        $region86: #{hca_layer.3} parent=77 // pred_fallthru
          _
      $region78: #{hca_layer.3} parent=5 // pred_fallthru
        _
      %p697 = scmp.le.s32.totalorder 2, %s12
      // Predicated region
      $region121: #{hca_layer.3} parent=5 // pred_check
        %p698 = pneg %p697
      $region122: #{hca_layer.3} parent=5 // pred_check_branch
        %700 = sbr.rel (%p698) target = $region124
      $region123: #{hca_layer.3} parent=5 // pred_region
        %s701 = ssub.s32 %s12, 2
        // Predicated region
        $region125: #{hca_layer.3} parent=123 // pred_check
          %p702 = pneg %p193
        $region126: #{hca_layer.3} parent=123 // pred_check_branch
          %704 = sbr.rel (%p702) target = $region128
        $region127: #{hca_layer.3} parent=123 // pred_region
          %s705 = sand.u32 %s178, 1
          %s706 = sand.u32 %s178, 1
          %s707 = smul.addr %s706, 64
          %s708 = scalar_lea.vmem [#allocation3], %s707
        $region128: #{hca_layer.3} parent=123 // pred_fallthru
          _
      $region124: #{hca_layer.3} parent=5 // pred_fallthru
        _
    $region6: #{hca_layer.3} parent=1 // loop_footer
      %s16 = sadd.s32 1, %s12
    $region7: #{hca_layer.3} parent=1 // loop_footer_branch
      %11 = sbr.rel target = $region3
    $region8: #{hca_layer.3} parent=1 // loop_exit
      _

</llo_original>
